<compile_context>
chip_gen: v5e
topology: v5e:2x2
jax: 0.10.0
libtpu: 0.0.40
codegen_flags: <defaults>
</compile_context>

<pallas_src>
import jax
import jax.numpy as jnp
from jax.experimental import pallas as pl
from jax.experimental.pallas import tpu as pltpu


def _round_up(x, m):
    return -(-x // m) * m


def _fold_subpixel_weights(w_oihw):
    """(Cout, Cin, 3, 3) OIHW -> (16, Cin, Cout) effective 2x2 sub-pixel taps.

    tap index = ((pi*2 + pj)*2 + a)*2 + b, pi/pj = output phase, a/b = 2x2 tap offset.
    Phase 0 groups kernel taps {0} / {1,2}; phase 1 groups {0,1} / {2} (per axis).
    """
    w = jnp.transpose(w_oihw, (2, 3, 1, 0)).astype(jnp.float32)   # (ky, kx, Cin, Cout)
    groups = {0: ((0,), (1, 2)), 1: ((0, 1), (2,))}
    taps = []
    for pi in range(2):
        for pj in range(2):
            for a in range(2):
                for b in range(2):
                    acc = None
                    for ky in groups[pi][a]:
                        for kx in groups[pj][b]:
                            term = w[ky, kx]
                            acc = term if acc is None else acc + term
                    taps.append(acc)
    return jnp.stack(taps, axis=0)                                # (16, Cin, Cout)


def _vmem_budget():
    """(tile-selection budget bytes, vmem_limit_bytes) chosen per TPU generation."""
    cap = None
    try:
        info = pltpu.get_tpu_info()
        for attr in ("vmem_capacity_bytes", "vmem_bytes", "vmem_size_bytes"):
            cap = getattr(info, attr, None)
            if cap:
                break
    except Exception:
        cap = None
    if not cap:
        cap = 64 * 1024 * 1024            # assume the smallest generation (v7x: 64 MiB/TC)
    if cap <= 64 * 1024 * 1024:           # v7x
        return 44 * 1024 * 1024, 56 * 1024 * 1024
    return 64 * 1024 * 1024, 100 * 1024 * 1024      # v5e / v6e (128 MiB)


def _pick_tile_h(N, H, W, Cin, Cout, in_item, out_item, budget_bytes):
    """Largest even divisor of H whose per-step VMEM footprint fits; prefer >= 2 grid steps."""
    lane_in = _round_up(Cin, 128)
    lane_w = _round_up(Cout, 128)
    lane_out = _round_up(2 * Cout, 128)
    sub_wp2 = _round_up(W + 2, 8)
    sub_w = _round_up(W, 8)

    def fits(th):
        in_blk = (th + 8) * sub_wp2 * lane_in * in_item * 2          # main + halo, dbl-buffered
        w_blk = 16 * _round_up(Cin, 8) * lane_w * in_item * 2        # dbl-buffered constants
        out_blk = th * 2 * sub_w * lane_out * out_item * 2           # dbl-buffered output
        work = (th + 2) * sub_wp2 * lane_in * in_item                # stitched (TH+2)-row window
        work += 3 * (th + 2) * sub_w * lane_in * in_item             # 3 column-shift windows
        work += 3 * th * sub_w * lane_out * 4                        # f32 acc / relu / concat values
        return in_blk + w_blk + out_blk + work + (2 << 20) <= budget_bytes

    cands = [th for th in range(2, H + 1, 2) if H % th == 0 and fits(th)]
    if not cands:
        return 2
    multi = [th for th in cands if N * (H // th) >= 2]               # keep v7x's 2nd core busy
    return max(multi) if multi else max(cands)


def _up_conv_kernel(x_ref, halo_ref, w_ref, scale_ref, bias_ref, o_ref):
    # x_ref:    (1, TH, W+2, Cin)   main rows of the zero-padded ORIGINAL-res input (NHWC)
    # halo_ref: (1, 2,  W+2, Cin)   the next two padded rows
    # w_ref:    (16, Cin, Cout)     folded sub-pixel taps, tap = ((pi*2+pj)*2+a)*2+b
    # scale_ref/bias_ref: (1, Cout) f32 folded BN scale / (conv bias + BN) shift
    # o_ref:    (1, TH, 2, W, 2*Cout) out dtype; reshapes for free to (2H, 2W, Cout) outside
    TH = x_ref.shape[1]
    W = x_ref.shape[2] - 2
    Cin = x_ref.shape[3]
    Cout = w_ref.shape[2]

    # One row-concat builds the (TH+2, W+2, Cin) window (single copy of the input block).
    xw = jnp.concatenate([x_ref[0], halo_ref[0]], axis=0)

    # Three column-shifted windows, flattened to matmul-LHS layout once each.
    # TODO(synk): the off-by-1/2 column slices are sublane-misaligned relayouts; pltpu.roll on
    #             the (otherwise idle) XLU could hide them behind MXU work.
    xc = [xw[:, t:t + W, :].reshape((TH + 2) * W, Cin) for t in range(3)]

    scale = scale_ref[0]                                             # (Cout,) f32
    shift = bias_ref[0]                                              # (Cout,) f32

    for pi in range(2):
        ys = []
        for pj in range(2):
            acc = jnp.zeros((TH * W, Cout), jnp.float32)
            for a in range(2):
                for b in range(2):
                    s, t = pi + a, pj + b
                    tap = ((pi * 2 + pj) * 2 + a) * 2 + b
                    # Per-tap row window of the pre-built column window (free leading-dim
                    # offset when W % 8 == 0); (TH*W, Cin) @ (Cin, Cout) on the MXU, f32 acc.
                    acc = acc + jnp.dot(xc[t][s * W:(s + TH) * W, :], w_ref[tap],
                                        preferred_element_type=jnp.float32)
            # Folded BatchNorm (eval) affine + ReLU, in f32.
            ys.append(jnp.maximum(acc * scale + shift, 0.0))
        # Lane-concat both column phases -> full trailing-dims store (never masked).
        y_cat = jnp.concatenate(ys, axis=-1).reshape(TH, W, 2 * Cout)
        o_ref[0, :, pi, :, :] = y_cat.astype(o_ref.dtype)


def up_conv_forward_nhwc(x_nhwc, w_oihw, conv_bias, gamma, beta, run_mean, run_var,
                         eps=1e-5, *, tile_h=None, compute_dtype=jnp.bfloat16,
                         out_dtype=None):
    """NHWC fast path: (N, H, W, Cin) -> (N, 2H, 2W, Cout), no layout transposes."""
    N, H, W, Cin = x_nhwc.shape
    Cout = w_oihw.shape[0]
    out_dtype = compute_dtype if out_dtype is None else out_dtype
    assert H % 2 == 0, "even H required (2-row halo blocks)"  # TODO(synk): odd H needs 1-row halos

    # Zero-pad by 1 at ORIGINAL resolution + cast (single fused host pass; no upsampled tensor).
    x_pad = jnp.pad(x_nhwc, ((0, 0), (1, 1), (1, 1), (0, 0))).astype(compute_dtype)

    w_eff = _fold_subpixel_weights(w_oihw).astype(compute_dtype)     # (16, Cin, Cout)

    # Fold BN (eval) into per-channel scale/shift: y = conv(x)*s + ((b - mean)*s + beta).
    bn_scale = gamma / jnp.sqrt(run_var + eps)
    eff_bias = (conv_bias - run_mean) * bn_scale + beta
    scale2d = bn_scale.reshape(1, Cout).astype(jnp.float32)
    bias2d = eff_bias.reshape(1, Cout).astype(jnp.float32)

    budget, vmem_limit = _vmem_budget()
    in_item = jnp.dtype(compute_dtype).itemsize
    out_item = jnp.dtype(out_dtype).itemsize
    if tile_h is None:
        tile_h = _pick_tile_h(N, H, W, Cin, Cout, in_item, out_item, budget)
    assert H % tile_h == 0 and tile_h % 2 == 0, (H, tile_h)
    grid = (N, H // tile_h)
    half_th = tile_h // 2

    flops = 2 * 16 * N * H * W * Cin * Cout
    bytes_accessed = (x_pad.size * in_item + w_eff.size * in_item
                      + N * H * 2 * W * 2 * Cout * out_item + 2 * Cout * 4)

    out5 = pl.pallas_call(
        _up_conv_kernel,
        out_shape=jax.ShapeDtypeStruct((N, H, 2, W, 2 * Cout), out_dtype),
        grid_spec=pltpu.PrefetchScalarGridSpec(
            num_scalar_prefetch=0,
            grid=grid,
            in_specs=[
                # main tile rows [h*TH, (h+1)*TH) of the padded input
                pl.BlockSpec((1, tile_h, W + 2, Cin), lambda n, h: (n, h, 0, 0)),
                # single 2-row halo block: padded rows (h+1)*TH and (h+1)*TH + 1
                pl.BlockSpec((1, 2, W + 2, Cin),
                             lambda n, h: (n, (h + 1) * half_th, 0, 0)),
                # weights / BN scale / shift: same block every step -> stay VMEM resident
                pl.BlockSpec((16, Cin, Cout), lambda n, h: (0, 0, 0)),
                pl.BlockSpec((1, Cout), lambda n, h: (0, 0)),
                pl.BlockSpec((1, Cout), lambda n, h: (0, 0)),
            ],
            out_specs=pl.BlockSpec((1, tile_h, 2, W, 2 * Cout),
                                   lambda n, h: (n, h, 0, 0, 0)),
        ),
        compiler_params=pltpu.CompilerParams(
            dimension_semantics=("parallel", "parallel"),
            vmem_limit_bytes=vmem_limit),
        cost_estimate=pl.CostEstimate(flops=flops, transcendentals=0,
                                      bytes_accessed=bytes_accessed),
    )(x_pad, x_pad, w_eff, scale2d, bias2d)

    # Free reshape: contiguous-axis merges (H,2)->2H and (W,2*Cout)->(2W,Cout).
    return out5.reshape(N, 2 * H, 2 * W, Cout)


def up_conv_forward(x_nchw, w_oihw, conv_bias, gamma, beta, run_mean, run_var,
                    eps=1e-5, *, tile_h=None, compute_dtype=jnp.bfloat16,
                    out_dtype=None):
    """PyTorch-layout API: (N, Cin, H, W) -> (N, Cout, 2H, 2W).

    The NHWC<->NCHW transposes here exist only to match the nn.Module contract; in an
    NHWC pipeline call up_conv_forward_nhwc directly and skip both extra HBM passes.
    """
    x_nhwc = jnp.transpose(x_nchw, (0, 2, 3, 1))
    y = up_conv_forward_nhwc(x_nhwc, w_oihw, conv_bias, gamma, beta, run_mean,
                             run_var, eps, tile_h=tile_h,
                             compute_dtype=compute_dtype, out_dtype=out_dtype)
    return jnp.transpose(y, (0, 3, 1, 2))


def _reference(x_nchw, w_oihw, conv_bias, gamma, beta, run_mean, run_var, eps=1e-5):
    x_up = jnp.repeat(jnp.repeat(x_nchw, 2, axis=2), 2, axis=3)
    y = jax.lax.conv_general_dilated(
        x_up, w_oihw, window_strides=(1, 1), padding="SAME",
        dimension_numbers=("NCHW", "OIHW", "NCHW"))
    y = y + conv_bias[None, :, None, None]
    y = (y - run_mean[None, :, None, None]) / jnp.sqrt(
        run_var + eps)[None, :, None, None]
    y = y * gamma[None, :, None, None] + beta[None, :, None, None]
    return jnp.maximum(y, 0.0)


if __name__ == "__main__":
    key = jax.random.PRNGKey(0)
    k_x, k_w, k_b, k_g, k_be, k_m, k_v = jax.random.split(key, 7)

    N, Cin, Cout, H, W = 2, 4, 8, 16, 16

    x = jax.random.normal(k_x, (N, Cin, H, W), dtype=jnp.float32)
    w = jax.random.normal(k_w, (Cout, Cin, 3, 3), dtype=jnp.float32) * 0.1
    conv_bias = jax.random.normal(k_b, (Cout,), dtype=jnp.float32) * 0.1
    gamma = 1.0 + 0.1 * jax.random.normal(k_g, (Cout,), dtype=jnp.float32)
    beta = 0.1 * jax.random.normal(k_be, (Cout,), dtype=jnp.float32)
    run_mean = 0.1 * jax.random.normal(k_m, (Cout,), dtype=jnp.float32)
    run_var = 1.0 + 0.1 * jnp.abs(jax.random.normal(k_v, (Cout,), dtype=jnp.float32))

    ref = _reference(x, w, conv_bias, gamma, beta, run_mean, run_var)

    # f32 compute+output path: tight check of sub-pixel decomposition / halo tiling / BN fold.
    out_f32 = jax.block_until_ready(up_conv_forward(
        x, w, conv_bias, gamma, beta, run_mean, run_var,
        tile_h=8, compute_dtype=jnp.float32))
    assert out_f32.shape == (N, Cout, 2 * H, 2 * W), out_f32.shape
    assert jnp.allclose(out_f32, ref, atol=1e-4, rtol=1e-4), float(
        jnp.max(jnp.abs(out_f32 - ref)))

    # Default path: bf16 matmuls + bf16 output (auto tile_h / generation-aware VMEM budget).
    out_bf16 = jax.block_until_ready(up_conv_forward(
        x, w, conv_bias, gamma, beta, run_mean, run_var))
    assert out_bf16.shape == (N, Cout, 2 * H, 2 * W), out_bf16.shape
    assert jnp.allclose(out_bf16.astype(jnp.float32), ref, atol=5e-2, rtol=5e-2), float(
        jnp.max(jnp.abs(out_bf16.astype(jnp.float32) - ref)))

    print("KERNEL_OK")
</pallas_src>

<mosaic_0001>
module attributes {stable_mosaic.version = 11 : i64} {
  func.func @_up_conv_kernel(%arg0: i32, %arg1: i32, %arg2: memref<1x8x18x4xf32, #tpu.memory_space<vmem>>, %arg3: memref<1x2x18x4xf32, #tpu.memory_space<vmem>>, %arg4: memref<16x4x8xf32, #tpu.memory_space<vmem>>, %arg5: memref<1x8xf32, #tpu.memory_space<vmem>>, %arg6: memref<1x8xf32, #tpu.memory_space<vmem>>, %arg7: memref<1x8x2x16x16xf32, #tpu.memory_space<vmem>>) attributes {dimension_semantics = [#tpu.dimension_semantics<parallel>, #tpu.dimension_semantics<parallel>], iteration_bounds = array<i64: 2, 2>, scalar_prefetch = 0 : i64, scratch_operands = 0 : i64, tpu.core_type = #tpu.core_type<tc>, window_params = [{transform_indices = @transform_0, window_bounds = array<i64: 1, 8, 18, 4>}, {transform_indices = @transform_1, window_bounds = array<i64: 1, 2, 18, 4>}, {pipeline_mode = #tpu.pipeline_mode<synchronous>, transform_indices = @transform_2, window_bounds = array<i64: 16, 4, 8>}, {pipeline_mode = #tpu.pipeline_mode<synchronous>, transform_indices = @transform_3, window_bounds = array<i64: 1, 8>}, {pipeline_mode = #tpu.pipeline_mode<synchronous>, transform_indices = @transform_4, window_bounds = array<i64: 1, 8>}, {transform_indices = @transform_5, window_bounds = array<i64: 1, 8, 2, 16, 16>}]} {
    %c0 = arith.constant 0 : index
    %c0_0 = arith.constant 0 : index
    %c0_1 = arith.constant 0 : index
    %c0_2 = arith.constant 0 : index
    %0 = vector.load %arg2[%c0, %c0_0, %c0_1, %c0_2] : memref<1x8x18x4xf32, #tpu.memory_space<vmem>>, vector<1x8x18x4xf32>
    %1 = vector.shape_cast %0 : vector<1x8x18x4xf32> to vector<8x18x4xf32>
    %c0_3 = arith.constant 0 : index
    %c0_4 = arith.constant 0 : index
    %c0_5 = arith.constant 0 : index
    %c0_6 = arith.constant 0 : index
    %2 = vector.load %arg3[%c0_3, %c0_4, %c0_5, %c0_6] : memref<1x2x18x4xf32, #tpu.memory_space<vmem>>, vector<1x2x18x4xf32>
    %3 = vector.shape_cast %2 : vector<1x2x18x4xf32> to vector<2x18x4xf32>
    %4 = tpu.concatenate %1, %3 in 0 : vector<8x18x4xf32>, vector<2x18x4xf32> -> vector<10x18x4xf32>
    %5 = vector.extract_strided_slice %4 {offsets = [0, 0, 0], sizes = [10, 16, 4], strides = [1, 1, 1]} : vector<10x18x4xf32> to vector<10x16x4xf32>
    %6 = vector.shape_cast %5 : vector<10x16x4xf32> to vector<160x4xf32>
    %7 = vector.extract_strided_slice %4 {offsets = [0, 1, 0], sizes = [10, 16, 4], strides = [1, 1, 1]} : vector<10x18x4xf32> to vector<10x16x4xf32>
    %8 = vector.shape_cast %7 : vector<10x16x4xf32> to vector<160x4xf32>
    %9 = vector.extract_strided_slice %4 {offsets = [0, 2, 0], sizes = [10, 16, 4], strides = [1, 1, 1]} : vector<10x18x4xf32> to vector<10x16x4xf32>
    %10 = vector.shape_cast %9 : vector<10x16x4xf32> to vector<160x4xf32>
    %c0_7 = arith.constant 0 : index
    %c0_8 = arith.constant 0 : index
    %11 = vector.load %arg5[%c0_7, %c0_8] : memref<1x8xf32, #tpu.memory_space<vmem>>, vector<1x8xf32>
    %12 = vector.shape_cast %11 : vector<1x8xf32> to vector<8xf32>
    %c0_9 = arith.constant 0 : index
    %c0_10 = arith.constant 0 : index
    %13 = vector.load %arg6[%c0_9, %c0_10] : memref<1x8xf32, #tpu.memory_space<vmem>>, vector<1x8xf32>
    %14 = vector.shape_cast %13 : vector<1x8xf32> to vector<8xf32>
    %cst = arith.constant 0.000000e+00 : f32
    %15 = vector.broadcast %cst : f32 to vector<128x8xf32>
    %16 = vector.extract_strided_slice %6 {offsets = [0, 0], sizes = [128, 4], strides = [1, 1]} : vector<160x4xf32> to vector<128x4xf32>
    %c0_11 = arith.constant 0 : index
    %c0_12 = arith.constant 0 : index
    %c0_13 = arith.constant 0 : index
    %17 = vector.load %arg4[%c0_11, %c0_12, %c0_13] : memref<16x4x8xf32, #tpu.memory_space<vmem>>, vector<1x4x8xf32>
    %18 = vector.shape_cast %17 : vector<1x4x8xf32> to vector<4x8xf32>
    %cst_14 = arith.constant dense<0.000000e+00> : vector<128x8xf32>
    %19 = tpu.matmul %16, %18, %cst_14 {dimension_numbers = #tpu.dot_dimension_numbers<[1], [0], [0], [1], [0, 0, 1, 1], [], []>} : vector<128x4xf32>, vector<4x8xf32>, vector<128x8xf32> -> vector<128x8xf32>
    %20 = arith.addf %15, %19 : vector<128x8xf32>
    %21 = vector.extract_strided_slice %8 {offsets = [0, 0], sizes = [128, 4], strides = [1, 1]} : vector<160x4xf32> to vector<128x4xf32>
    %c1 = arith.constant 1 : index
    %c0_15 = arith.constant 0 : index
    %c0_16 = arith.constant 0 : index
    %22 = vector.load %arg4[%c1, %c0_15, %c0_16] : memref<16x4x8xf32, #tpu.memory_space<vmem>>, vector<1x4x8xf32>
    %23 = vector.shape_cast %22 : vector<1x4x8xf32> to vector<4x8xf32>
    %cst_17 = arith.constant dense<0.000000e+00> : vector<128x8xf32>
    %24 = tpu.matmul %21, %23, %cst_17 {dimension_numbers = #tpu.dot_dimension_numbers<[1], [0], [0], [1], [0, 0, 1, 1], [], []>} : vector<128x4xf32>, vector<4x8xf32>, vector<128x8xf32> -> vector<128x8xf32>
    %25 = arith.addf %20, %24 : vector<128x8xf32>
    %26 = vector.extract_strided_slice %6 {offsets = [16, 0], sizes = [128, 4], strides = [1, 1]} : vector<160x4xf32> to vector<128x4xf32>
    %c2 = arith.constant 2 : index
    %c0_18 = arith.constant 0 : index
    %c0_19 = arith.constant 0 : index
    %27 = vector.load %arg4[%c2, %c0_18, %c0_19] : memref<16x4x8xf32, #tpu.memory_space<vmem>>, vector<1x4x8xf32>
    %28 = vector.shape_cast %27 : vector<1x4x8xf32> to vector<4x8xf32>
    %cst_20 = arith.constant dense<0.000000e+00> : vector<128x8xf32>
    %29 = tpu.matmul %26, %28, %cst_20 {dimension_numbers = #tpu.dot_dimension_numbers<[1], [0], [0], [1], [0, 0, 1, 1], [], []>} : vector<128x4xf32>, vector<4x8xf32>, vector<128x8xf32> -> vector<128x8xf32>
    %30 = arith.addf %25, %29 : vector<128x8xf32>
    %31 = vector.extract_strided_slice %8 {offsets = [16, 0], sizes = [128, 4], strides = [1, 1]} : vector<160x4xf32> to vector<128x4xf32>
    %c3 = arith.constant 3 : index
    %c0_21 = arith.constant 0 : index
    %c0_22 = arith.constant 0 : index
    %32 = vector.load %arg4[%c3, %c0_21, %c0_22] : memref<16x4x8xf32, #tpu.memory_space<vmem>>, vector<1x4x8xf32>
    %33 = vector.shape_cast %32 : vector<1x4x8xf32> to vector<4x8xf32>
    %cst_23 = arith.constant dense<0.000000e+00> : vector<128x8xf32>
    %34 = tpu.matmul %31, %33, %cst_23 {dimension_numbers = #tpu.dot_dimension_numbers<[1], [0], [0], [1], [0, 0, 1, 1], [], []>} : vector<128x4xf32>, vector<4x8xf32>, vector<128x8xf32> -> vector<128x8xf32>
    %35 = arith.addf %30, %34 : vector<128x8xf32>
    %36 = vector.shape_cast %12 : vector<8xf32> to vector<1x8xf32>
    %37 = vector.broadcast %36 : vector<1x8xf32> to vector<128x8xf32>
    %38 = arith.mulf %35, %37 : vector<128x8xf32>
    %39 = vector.shape_cast %14 : vector<8xf32> to vector<1x8xf32>
    %40 = vector.broadcast %39 : vector<1x8xf32> to vector<128x8xf32>
    %41 = arith.addf %38, %40 : vector<128x8xf32>
    %cst_24 = arith.constant 0.000000e+00 : f32
    %42 = vector.broadcast %cst_24 : f32 to vector<128x8xf32>
    %43 = arith.maximumf %41, %42 : vector<128x8xf32>
    %cst_25 = arith.constant 0.000000e+00 : f32
    %44 = vector.broadcast %cst_25 : f32 to vector<128x8xf32>
    %45 = vector.extract_strided_slice %8 {offsets = [0, 0], sizes = [128, 4], strides = [1, 1]} : vector<160x4xf32> to vector<128x4xf32>
    %c4 = arith.constant 4 : index
    %c0_26 = arith.constant 0 : index
    %c0_27 = arith.constant 0 : index
    %46 = vector.load %arg4[%c4, %c0_26, %c0_27] : memref<16x4x8xf32, #tpu.memory_space<vmem>>, vector<1x4x8xf32>
    %47 = vector.shape_cast %46 : vector<1x4x8xf32> to vector<4x8xf32>
    %cst_28 = arith.constant dense<0.000000e+00> : vector<128x8xf32>
    %48 = tpu.matmul %45, %47, %cst_28 {dimension_numbers = #tpu.dot_dimension_numbers<[1], [0], [0], [1], [0, 0, 1, 1], [], []>} : vector<128x4xf32>, vector<4x8xf32>, vector<128x8xf32> -> vector<128x8xf32>
    %49 = arith.addf %44, %48 : vector<128x8xf32>
    %50 = vector.extract_strided_slice %10 {offsets = [0, 0], sizes = [128, 4], strides = [1, 1]} : vector<160x4xf32> to vector<128x4xf32>
    %c5 = arith.constant 5 : index
    %c0_29 = arith.constant 0 : index
    %c0_30 = arith.constant 0 : index
    %51 = vector.load %arg4[%c5, %c0_29, %c0_30] : memref<16x4x8xf32, #tpu.memory_space<vmem>>, vector<1x4x8xf32>
    %52 = vector.shape_cast %51 : vector<1x4x8xf32> to vector<4x8xf32>
    %cst_31 = arith.constant dense<0.000000e+00> : vector<128x8xf32>
    %53 = tpu.matmul %50, %52, %cst_31 {dimension_numbers = #tpu.dot_dimension_numbers<[1], [0], [0], [1], [0, 0, 1, 1], [], []>} : vector<128x4xf32>, vector<4x8xf32>, vector<128x8xf32> -> vector<128x8xf32>
    %54 = arith.addf %49, %53 : vector<128x8xf32>
    %55 = vector.extract_strided_slice %8 {offsets = [16, 0], sizes = [128, 4], strides = [1, 1]} : vector<160x4xf32> to vector<128x4xf32>
    %c6 = arith.constant 6 : index
    %c0_32 = arith.constant 0 : index
    %c0_33 = arith.constant 0 : index
    %56 = vector.load %arg4[%c6, %c0_32, %c0_33] : memref<16x4x8xf32, #tpu.memory_space<vmem>>, vector<1x4x8xf32>
    %57 = vector.shape_cast %56 : vector<1x4x8xf32> to vector<4x8xf32>
    %cst_34 = arith.constant dense<0.000000e+00> : vector<128x8xf32>
    %58 = tpu.matmul %55, %57, %cst_34 {dimension_numbers = #tpu.dot_dimension_numbers<[1], [0], [0], [1], [0, 0, 1, 1], [], []>} : vector<128x4xf32>, vector<4x8xf32>, vector<128x8xf32> -> vector<128x8xf32>
    %59 = arith.addf %54, %58 : vector<128x8xf32>
    %60 = vector.extract_strided_slice %10 {offsets = [16, 0], sizes = [128, 4], strides = [1, 1]} : vector<160x4xf32> to vector<128x4xf32>
    %c7 = arith.constant 7 : index
    %c0_35 = arith.constant 0 : index
    %c0_36 = arith.constant 0 : index
    %61 = vector.load %arg4[%c7, %c0_35, %c0_36] : memref<16x4x8xf32, #tpu.memory_space<vmem>>, vector<1x4x8xf32>
    %62 = vector.shape_cast %61 : vector<1x4x8xf32> to vector<4x8xf32>
    %cst_37 = arith.constant dense<0.000000e+00> : vector<128x8xf32>
    %63 = tpu.matmul %60, %62, %cst_37 {dimension_numbers = #tpu.dot_dimension_numbers<[1], [0], [0], [1], [0, 0, 1, 1], [], []>} : vector<128x4xf32>, vector<4x8xf32>, vector<128x8xf32> -> vector<128x8xf32>
    %64 = arith.addf %59, %63 : vector<128x8xf32>
    %65 = vector.shape_cast %12 : vector<8xf32> to vector<1x8xf32>
    %66 = vector.broadcast %65 : vector<1x8xf32> to vector<128x8xf32>
    %67 = arith.mulf %64, %66 : vector<128x8xf32>
    %68 = vector.shape_cast %14 : vector<8xf32> to vector<1x8xf32>
    %69 = vector.broadcast %68 : vector<1x8xf32> to vector<128x8xf32>
    %70 = arith.addf %67, %69 : vector<128x8xf32>
    %cst_38 = arith.constant 0.000000e+00 : f32
    %71 = vector.broadcast %cst_38 : f32 to vector<128x8xf32>
    %72 = arith.maximumf %70, %71 : vector<128x8xf32>
    %73 = tpu.concatenate %43, %72 in 1 : vector<128x8xf32>, vector<128x8xf32> -> vector<128x16xf32>
    %74 = vector.shape_cast %73 : vector<128x16xf32> to vector<8x16x16xf32>
    %c0_39 = arith.constant 0 : index
    %c0_40 = arith.constant 0 : index
    %c0_41 = arith.constant 0 : index
    %c0_42 = arith.constant 0 : index
    %c0_43 = arith.constant 0 : index
    %75 = vector.load %arg7[%c0_39, %c0_40, %c0_41, %c0_42, %c0_43] : memref<1x8x2x16x16xf32, #tpu.memory_space<vmem>>, vector<1x8x1x16x16xf32>
    %76 = vector.shape_cast %75 : vector<1x8x1x16x16xf32> to vector<8x16x16xf32>
    %77 = vector.shape_cast %74 : vector<8x16x16xf32> to vector<1x8x1x16x16xf32>
    tpu.vector_store %arg7[%c0_39, %c0_40, %c0_41, %c0_42, %c0_43], %77 {strides = array<i32>} : memref<1x8x2x16x16xf32, #tpu.memory_space<vmem>>, vector<1x8x1x16x16xf32>,
    %cst_44 = arith.constant 0.000000e+00 : f32
    %78 = vector.broadcast %cst_44 : f32 to vector<128x8xf32>
    %79 = vector.extract_strided_slice %6 {offsets = [16, 0], sizes = [128, 4], strides = [1, 1]} : vector<160x4xf32> to vector<128x4xf32>
    %c8 = arith.constant 8 : index
    %c0_45 = arith.constant 0 : index
    %c0_46 = arith.constant 0 : index
    %80 = vector.load %arg4[%c8, %c0_45, %c0_46] : memref<16x4x8xf32, #tpu.memory_space<vmem>>, vector<1x4x8xf32>
    %81 = vector.shape_cast %80 : vector<1x4x8xf32> to vector<4x8xf32>
    %cst_47 = arith.constant dense<0.000000e+00> : vector<128x8xf32>
    %82 = tpu.matmul %79, %81, %cst_47 {dimension_numbers = #tpu.dot_dimension_numbers<[1], [0], [0], [1], [0, 0, 1, 1], [], []>} : vector<128x4xf32>, vector<4x8xf32>, vector<128x8xf32> -> vector<128x8xf32>
    %83 = arith.addf %78, %82 : vector<128x8xf32>
    %84 = vector.extract_strided_slice %8 {offsets = [16, 0], sizes = [128, 4], strides = [1, 1]} : vector<160x4xf32> to vector<128x4xf32>
    %c9 = arith.constant 9 : index
    %c0_48 = arith.constant 0 : index
    %c0_49 = arith.constant 0 : index
    %85 = vector.load %arg4[%c9, %c0_48, %c0_49] : memref<16x4x8xf32, #tpu.memory_space<vmem>>, vector<1x4x8xf32>
    %86 = vector.shape_cast %85 : vector<1x4x8xf32> to vector<4x8xf32>
    %cst_50 = arith.constant dense<0.000000e+00> : vector<128x8xf32>
    %87 = tpu.matmul %84, %86, %cst_50 {dimension_numbers = #tpu.dot_dimension_numbers<[1], [0], [0], [1], [0, 0, 1, 1], [], []>} : vector<128x4xf32>, vector<4x8xf32>, vector<128x8xf32> -> vector<128x8xf32>
    %88 = arith.addf %83, %87 : vector<128x8xf32>
    %89 = vector.extract_strided_slice %6 {offsets = [32, 0], sizes = [128, 4], strides = [1, 1]} : vector<160x4xf32> to vector<128x4xf32>
    %c10 = arith.constant 10 : index
    %c0_51 = arith.constant 0 : index
    %c0_52 = arith.constant 0 : index
    %90 = vector.load %arg4[%c10, %c0_51, %c0_52] : memref<16x4x8xf32, #tpu.memory_space<vmem>>, vector<1x4x8xf32>
    %91 = vector.shape_cast %90 : vector<1x4x8xf32> to vector<4x8xf32>
    %cst_53 = arith.constant dense<0.000000e+00> : vector<128x8xf32>
    %92 = tpu.matmul %89, %91, %cst_53 {dimension_numbers = #tpu.dot_dimension_numbers<[1], [0], [0], [1], [0, 0, 1, 1], [], []>} : vector<128x4xf32>, vector<4x8xf32>, vector<128x8xf32> -> vector<128x8xf32>
    %93 = arith.addf %88, %92 : vector<128x8xf32>
    %94 = vector.extract_strided_slice %8 {offsets = [32, 0], sizes = [128, 4], strides = [1, 1]} : vector<160x4xf32> to vector<128x4xf32>
    %c11 = arith.constant 11 : index
    %c0_54 = arith.constant 0 : index
    %c0_55 = arith.constant 0 : index
    %95 = vector.load %arg4[%c11, %c0_54, %c0_55] : memref<16x4x8xf32, #tpu.memory_space<vmem>>, vector<1x4x8xf32>
    %96 = vector.shape_cast %95 : vector<1x4x8xf32> to vector<4x8xf32>
    %cst_56 = arith.constant dense<0.000000e+00> : vector<128x8xf32>
    %97 = tpu.matmul %94, %96, %cst_56 {dimension_numbers = #tpu.dot_dimension_numbers<[1], [0], [0], [1], [0, 0, 1, 1], [], []>} : vector<128x4xf32>, vector<4x8xf32>, vector<128x8xf32> -> vector<128x8xf32>
    %98 = arith.addf %93, %97 : vector<128x8xf32>
    %99 = vector.shape_cast %12 : vector<8xf32> to vector<1x8xf32>
    %100 = vector.broadcast %99 : vector<1x8xf32> to vector<128x8xf32>
    %101 = arith.mulf %98, %100 : vector<128x8xf32>
    %102 = vector.shape_cast %14 : vector<8xf32> to vector<1x8xf32>
    %103 = vector.broadcast %102 : vector<1x8xf32> to vector<128x8xf32>
    %104 = arith.addf %101, %103 : vector<128x8xf32>
    %cst_57 = arith.constant 0.000000e+00 : f32
    %105 = vector.broadcast %cst_57 : f32 to vector<128x8xf32>
    %106 = arith.maximumf %104, %105 : vector<128x8xf32>
    %cst_58 = arith.constant 0.000000e+00 : f32
    %107 = vector.broadcast %cst_58 : f32 to vector<128x8xf32>
    %108 = vector.extract_strided_slice %8 {offsets = [16, 0], sizes = [128, 4], strides = [1, 1]} : vector<160x4xf32> to vector<128x4xf32>
    %c12 = arith.constant 12 : index
    %c0_59 = arith.constant 0 : index
    %c0_60 = arith.constant 0 : index
    %109 = vector.load %arg4[%c12, %c0_59, %c0_60] : memref<16x4x8xf32, #tpu.memory_space<vmem>>, vector<1x4x8xf32>
    %110 = vector.shape_cast %109 : vector<1x4x8xf32> to vector<4x8xf32>
    %cst_61 = arith.constant dense<0.000000e+00> : vector<128x8xf32>
    %111 = tpu.matmul %108, %110, %cst_61 {dimension_numbers = #tpu.dot_dimension_numbers<[1], [0], [0], [1], [0, 0, 1, 1], [], []>} : vector<128x4xf32>, vector<4x8xf32>, vector<128x8xf32> -> vector<128x8xf32>
    %112 = arith.addf %107, %111 : vector<128x8xf32>
    %113 = vector.extract_strided_slice %10 {offsets = [16, 0], sizes = [128, 4], strides = [1, 1]} : vector<160x4xf32> to vector<128x4xf32>
    %c13 = arith.constant 13 : index
    %c0_62 = arith.constant 0 : index
    %c0_63 = arith.constant 0 : index
    %114 = vector.load %arg4[%c13, %c0_62, %c0_63] : memref<16x4x8xf32, #tpu.memory_space<vmem>>, vector<1x4x8xf32>
    %115 = vector.shape_cast %114 : vector<1x4x8xf32> to vector<4x8xf32>
    %cst_64 = arith.constant dense<0.000000e+00> : vector<128x8xf32>
    %116 = tpu.matmul %113, %115, %cst_64 {dimension_numbers = #tpu.dot_dimension_numbers<[1], [0], [0], [1], [0, 0, 1, 1], [], []>} : vector<128x4xf32>, vector<4x8xf32>, vector<128x8xf32> -> vector<128x8xf32>
    %117 = arith.addf %112, %116 : vector<128x8xf32>
    %118 = vector.extract_strided_slice %8 {offsets = [32, 0], sizes = [128, 4], strides = [1, 1]} : vector<160x4xf32> to vector<128x4xf32>
    %c14 = arith.constant 14 : index
    %c0_65 = arith.constant 0 : index
    %c0_66 = arith.constant 0 : index
    %119 = vector.load %arg4[%c14, %c0_65, %c0_66] : memref<16x4x8xf32, #tpu.memory_space<vmem>>, vector<1x4x8xf32>
    %120 = vector.shape_cast %119 : vector<1x4x8xf32> to vector<4x8xf32>
    %cst_67 = arith.constant dense<0.000000e+00> : vector<128x8xf32>
    %121 = tpu.matmul %118, %120, %cst_67 {dimension_numbers = #tpu.dot_dimension_numbers<[1], [0], [0], [1], [0, 0, 1, 1], [], []>} : vector<128x4xf32>, vector<4x8xf32>, vector<128x8xf32> -> vector<128x8xf32>
    %122 = arith.addf %117, %121 : vector<128x8xf32>
    %123 = vector.extract_strided_slice %10 {offsets = [32, 0], sizes = [128, 4], strides = [1, 1]} : vector<160x4xf32> to vector<128x4xf32>
    %c15 = arith.constant 15 : index
    %c0_68 = arith.constant 0 : index
    %c0_69 = arith.constant 0 : index
    %124 = vector.load %arg4[%c15, %c0_68, %c0_69] : memref<16x4x8xf32, #tpu.memory_space<vmem>>, vector<1x4x8xf32>
    %125 = vector.shape_cast %124 : vector<1x4x8xf32> to vector<4x8xf32>
    %cst_70 = arith.constant dense<0.000000e+00> : vector<128x8xf32>
    %126 = tpu.matmul %123, %125, %cst_70 {dimension_numbers = #tpu.dot_dimension_numbers<[1], [0], [0], [1], [0, 0, 1, 1], [], []>} : vector<128x4xf32>, vector<4x8xf32>, vector<128x8xf32> -> vector<128x8xf32>
    %127 = arith.addf %122, %126 : vector<128x8xf32>
    %128 = vector.shape_cast %12 : vector<8xf32> to vector<1x8xf32>
    %129 = vector.broadcast %128 : vector<1x8xf32> to vector<128x8xf32>
    %130 = arith.mulf %127, %129 : vector<128x8xf32>
    %131 = vector.shape_cast %14 : vector<8xf32> to vector<1x8xf32>
    %132 = vector.broadcast %131 : vector<1x8xf32> to vector<128x8xf32>
    %133 = arith.addf %130, %132 : vector<128x8xf32>
    %cst_71 = arith.constant 0.000000e+00 : f32
    %134 = vector.broadcast %cst_71 : f32 to vector<128x8xf32>
    %135 = arith.maximumf %133, %134 : vector<128x8xf32>
    %136 = tpu.concatenate %106, %135 in 1 : vector<128x8xf32>, vector<128x8xf32> -> vector<128x16xf32>
    %137 = vector.shape_cast %136 : vector<128x16xf32> to vector<8x16x16xf32>
    %c0_72 = arith.constant 0 : index
    %c0_73 = arith.constant 0 : index
    %c1_74 = arith.constant 1 : index
    %c0_75 = arith.constant 0 : index
    %c0_76 = arith.constant 0 : index
    %138 = vector.load %arg7[%c0_72, %c0_73, %c1_74, %c0_75, %c0_76] : memref<1x8x2x16x16xf32, #tpu.memory_space<vmem>>, vector<1x8x1x16x16xf32>
    %139 = vector.shape_cast %138 : vector<1x8x1x16x16xf32> to vector<8x16x16xf32>
    %140 = vector.shape_cast %137 : vector<8x16x16xf32> to vector<1x8x1x16x16xf32>
    tpu.vector_store %arg7[%c0_72, %c0_73, %c1_74, %c0_75, %c0_76], %140 {strides = array<i32>} : memref<1x8x2x16x16xf32, #tpu.memory_space<vmem>>, vector<1x8x1x16x16xf32>,
    return
  }
  func.func @transform_0(%arg0: i32, %arg1: i32) -> (i32, i32, i32, i32) {
    %c0_i32 = arith.constant 0 : i32
    %c0_i32_0 = arith.constant 0 : i32
    %c0_i32_1 = arith.constant 0 : i32
    return %arg0, %arg1, %c0_i32, %c0_i32_0 : i32, i32, i32, i32
  }
  func.func @transform_1(%arg0: i32, %arg1: i32) -> (i32, i32, i32, i32) {
    %c1_i32 = arith.constant 1 : i32
    %0 = arith.addi %arg1, %c1_i32 : i32
    %c4_i32 = arith.constant 4 : i32
    %1 = arith.muli %0, %c4_i32 : i32
    %c0_i32 = arith.constant 0 : i32
    %c0_i32_0 = arith.constant 0 : i32
    %c0_i32_1 = arith.constant 0 : i32
    return %arg0, %1, %c0_i32, %c0_i32_0 : i32, i32, i32, i32
  }
  func.func @transform_2(%arg0: i32, %arg1: i32) -> (i32, i32, i32) {
    %c0_i32 = arith.constant 0 : i32
    %c0_i32_0 = arith.constant 0 : i32
    %c0_i32_1 = arith.constant 0 : i32
    %c0_i32_2 = arith.constant 0 : i32
    return %c0_i32, %c0_i32_0, %c0_i32_1 : i32, i32, i32
  }
  func.func @transform_3(%arg0: i32, %arg1: i32) -> (i32, i32) {
    %c0_i32 = arith.constant 0 : i32
    %c0_i32_0 = arith.constant 0 : i32
    %c0_i32_1 = arith.constant 0 : i32
    return %c0_i32, %c0_i32_0 : i32, i32
  }
  func.func @transform_4(%arg0: i32, %arg1: i32) -> (i32, i32) {
    %c0_i32 = arith.constant 0 : i32
    %c0_i32_0 = arith.constant 0 : i32
    %c0_i32_1 = arith.constant 0 : i32
    return %c0_i32, %c0_i32_0 : i32, i32
  }
  func.func @transform_5(%arg0: i32, %arg1: i32) -> (i32, i32, i32, i32, i32) {
    %c0_i32 = arith.constant 0 : i32
    %c0_i32_0 = arith.constant 0 : i32
    %c0_i32_1 = arith.constant 0 : i32
    %c0_i32_2 = arith.constant 0 : i32
    return %arg0, %arg1, %c0_i32, %c0_i32_0, %c0_i32_1 : i32, i32, i32, i32, i32
  }
}

</mosaic_0001>

<llo_original>
// kernel: tpu_custom_call.1
$region0: #{tpu_custom_call.1}
  #allocation0 [shape = 'u32[]', space=smem, size = 0x4, offset = 0x4, fixed_abs, tag = 'smem constant byte address 0x4 - core index']
  #allocation1 [shape = 'u32[72,128]{1,0:T(1,128)}', space=vmem, size = 0x9000, scoped, tag = 'internal scratch']
  %s0 = inlined_call_operand.vmem [shape: f32[2,18,18,4], index: 0, kind: input, shape index: {}]
  %s1 = inlined_call_operand.vmem [shape: f32[2,18,18,4], index: 1, kind: input, shape index: {}]
  %s2 = inlined_call_operand.vmem [shape: f32[16,4,8], index: 2, kind: input, shape index: {}]
  %s3 = inlined_call_operand.vmem [shape: f32[1,8], index: 3, kind: input, shape index: {}]
  %s4 = inlined_call_operand.vmem [shape: f32[1,8], index: 4, kind: input, shape index: {}]
  %s5 = inlined_call_operand.hbm [shape: f32[2,16,2,16,16], index: 5, kind: output, shape index: {}]
  %s6 = sld [smem:[#allocation0]]
  $region53: #{tpu_custom_call.1} parent=0
    _
  %s8 = ssub.s32 1, %s6
  %s9 = scalar_select 0, %s8, %s6
  $region1: #{tpu_custom_call.1} parent=0
    #allocation2 [shape = 'u8[262144]{0}', space=vmem, size = 0x40000, scoped, tag = 'output window, operand 0']
    #allocation3 [shape = 's32[2]{0}', space=sflag, size = 0x8, scoped, tag = 'scoped memory for tpu_custom_call.1']
    %10 = vsyncpa [#allocation3], 0
    %s11 = scalar_lea.sflag [#allocation3], 1
    %12 = vsyncpa %s11, 0
    loop: start=0, step=1, limit=6
    $region2: #{tpu_custom_call.1} parent=1 // loop_pre_header
      _
    $region3: #{tpu_custom_call.1} parent=1 // loop_header
      %s14 = sphi 0, %s18
      %p15 = scmp.ge.s32.totalorder %s14, 6
      %s21 = sphi 0, %s33
      %s22 = sphi 0, %s29
      %s23 = sphi 0, %s21
      %s24 = sphi 0, %s22
      %s25 = sphi 0, %s23
      %s26 = sphi 0, %s24
      %s38 = sphi 0, %s40
      %s41 = sphi 0, %s38
      %s42 = sphi 0, %s41
      %s58 = sphi 0, %s42
      %s70 = sphi 0, %s72
      %s73 = sphi 0, %s70
      %s74 = sphi 0, %s73
      %s90 = sphi 0, %s74
      %s94 = sphi 0, %s94
      %s96 = sphi 0, %s94
      %s97 = sphi 0, %s96
      %s111 = sphi 0, %s97
      %s115 = sphi 0, %s115
      %s117 = sphi 0, %s115
      %s118 = sphi 0, %s117
      %s132 = sphi 0, %s118
      %s136 = sphi 0, %s136
      %s138 = sphi 0, %s136
      %s139 = sphi 0, %s138
      %s153 = sphi 0, %s139
      %s161 = sphi 0, %s163
      %s164 = sphi 0, %s161
      %s165 = sphi 0, %s164
      %s181 = sphi 0, %s165
    $region4: #{tpu_custom_call.1} parent=1 // loop_header_branch
      %17 = sbr.rel (%p15) target = $region8
    $region5: #{tpu_custom_call.1} parent=1 // loop_body
      %s19 = ssub.s32 %s14, 1
      %s20 = ssub.s32 %s14, 2
      %s27 = sadd.s32 1, %s22
      %p28 = scmp.ge.s32.totalorder %s27, 2
      %s29 = scalar_select %p28, 0, %s27
      %s30 = sadd.s32 1, %s21
      %s31 = scalar_select %p28, %s30, %s21
      %p32 = scmp.ge.s32.totalorder %s31, 2
      %s33 = scalar_select %p32, 0, %s31
      %s34 = ssub.s32 %s21, %s33
      %s35 = ssub.s32 %s22, %s29
      %s36 = sor.u32 %s34, %s35
      %p37 = scmp.eq.s32.totalorder %s36, 0
      %s39 = sadd.s32 %s38, 1
      %s40 = scalar_select %p37, %s38, %s39
      %p43 = pneg %p37
      %p44 = scmp.eq.s32.totalorder %s14, 3
      %p45 = por %p43, %p44
      %p46 = scmp.ne.s32.totalorder %s38, %s41
      %p47 = scmp.eq.s32.totalorder %s14, 0
      %p48 = por %p46, %p47
      %p49 = scmp.ne.s32.totalorder %s38, %s41
      %p50 = scmp.eq.s32.totalorder %s19, 3
      %p51 = por %p49, %p50
      %p52 = scmp.ne.s32.totalorder %s41, %s42
      %p53 = scmp.eq.s32.totalorder %s19, 0
      %p54 = por %p52, %p53
      %p55 = scmp.ne.s32.totalorder %s41, %s42
      %p56 = scmp.eq.s32.totalorder %s20, 3
      %p57 = por %p55, %p56
      %p59 = scmp.ne.s32.totalorder %s42, %s58
      %p60 = scmp.eq.s32.totalorder %s20, 0
      %p61 = por %p59, %p60
      %s62 = sadd.s32 %s22, 1
      %s63 = smul.u32 %s62, 4
      %s64 = sadd.s32 %s29, 1
      %s65 = smul.u32 %s64, 4
      %s66 = ssub.s32 %s21, %s33
      %s67 = ssub.s32 %s63, %s65
      %s68 = sor.u32 %s66, %s67
      %p69 = scmp.eq.s32.totalorder %s68, 0
      %s71 = sadd.s32 %s70, 1
      %s72 = scalar_select %p69, %s70, %s71
      %p75 = pneg %p69
      %p76 = scmp.eq.s32.totalorder %s14, 3
      %p77 = por %p75, %p76
      %p78 = scmp.ne.s32.totalorder %s70, %s73
      %p79 = scmp.eq.s32.totalorder %s14, 0
      %p80 = por %p78, %p79
      %p81 = scmp.ne.s32.totalorder %s70, %s73
      %p82 = scmp.eq.s32.totalorder %s19, 3
      %p83 = por %p81, %p82
      %p84 = scmp.ne.s32.totalorder %s73, %s74
      %p85 = scmp.eq.s32.totalorder %s19, 0
      %p86 = por %p84, %p85
      %p87 = scmp.ne.s32.totalorder %s73, %s74
      %p88 = scmp.eq.s32.totalorder %s20, 3
      %p89 = por %p87, %p88
      %p91 = scmp.ne.s32.totalorder %s74, %s90
      %p92 = scmp.eq.s32.totalorder %s20, 0
      %p93 = por %p91, %p92
      %s95 = sadd.s32 %s94, 1
      %p98 = scmp.eq.s32.totalorder %s14, 3
      %p99 = scmp.ne.s32.totalorder %s94, %s96
      %p100 = scmp.eq.s32.totalorder %s14, 0
      %p101 = por %p99, %p100
      %p102 = scmp.ne.s32.totalorder %s94, %s96
      %p103 = scmp.eq.s32.totalorder %s19, 3
      %p104 = por %p102, %p103
      %p105 = scmp.ne.s32.totalorder %s96, %s97
      %p106 = scmp.eq.s32.totalorder %s19, 0
      %p107 = por %p105, %p106
      %p108 = scmp.ne.s32.totalorder %s96, %s97
      %p109 = scmp.eq.s32.totalorder %s20, 3
      %p110 = por %p108, %p109
      %p112 = scmp.ne.s32.totalorder %s97, %s111
      %p113 = scmp.eq.s32.totalorder %s20, 0
      %p114 = por %p112, %p113
      %s116 = sadd.s32 %s115, 1
      %p119 = scmp.eq.s32.totalorder %s14, 3
      %p120 = scmp.ne.s32.totalorder %s115, %s117
      %p121 = scmp.eq.s32.totalorder %s14, 0
      %p122 = por %p120, %p121
      %p123 = scmp.ne.s32.totalorder %s115, %s117
      %p124 = scmp.eq.s32.totalorder %s19, 3
      %p125 = por %p123, %p124
      %p126 = scmp.ne.s32.totalorder %s117, %s118
      %p127 = scmp.eq.s32.totalorder %s19, 0
      %p128 = por %p126, %p127
      %p129 = scmp.ne.s32.totalorder %s117, %s118
      %p130 = scmp.eq.s32.totalorder %s20, 3
      %p131 = por %p129, %p130
      %p133 = scmp.ne.s32.totalorder %s118, %s132
      %p134 = scmp.eq.s32.totalorder %s20, 0
      %p135 = por %p133, %p134
      %s137 = sadd.s32 %s136, 1
      %p140 = scmp.eq.s32.totalorder %s14, 3
      %p141 = scmp.ne.s32.totalorder %s136, %s138
      %p142 = scmp.eq.s32.totalorder %s14, 0
      %p143 = por %p141, %p142
      %p144 = scmp.ne.s32.totalorder %s136, %s138
      %p145 = scmp.eq.s32.totalorder %s19, 3
      %p146 = por %p144, %p145
      %p147 = scmp.ne.s32.totalorder %s138, %s139
      %p148 = scmp.eq.s32.totalorder %s19, 0
      %p149 = por %p147, %p148
      %p150 = scmp.ne.s32.totalorder %s138, %s139
      %p151 = scmp.eq.s32.totalorder %s20, 3
      %p152 = por %p150, %p151
      %p154 = scmp.ne.s32.totalorder %s139, %s153
      %p155 = scmp.eq.s32.totalorder %s20, 0
      %p156 = por %p154, %p155
      %s157 = ssub.s32 %s21, %s33
      %s158 = ssub.s32 %s22, %s29
      %s159 = sor.u32 %s157, %s158
      %p160 = scmp.eq.s32.totalorder %s159, 0
      %s162 = sadd.s32 %s161, 1
      %s163 = scalar_select %p160, %s161, %s162
      %p166 = pneg %p160
      %p167 = scmp.eq.s32.totalorder %s14, 3
      %p168 = por %p166, %p167
      %p169 = scmp.ne.s32.totalorder %s161, %s164
      %p170 = scmp.eq.s32.totalorder %s14, 0
      %p171 = por %p169, %p170
      %p172 = scmp.ne.s32.totalorder %s161, %s164
      %p173 = scmp.eq.s32.totalorder %s19, 3
      %p174 = por %p172, %p173
      %p175 = scmp.ne.s32.totalorder %s164, %s165
      %p176 = scmp.eq.s32.totalorder %s19, 0
      %p177 = por %p175, %p176
      %p178 = scmp.ne.s32.totalorder %s164, %s165
      %p179 = scmp.eq.s32.totalorder %s20, 3
      %p180 = por %p178, %p179
      %p182 = scmp.ne.s32.totalorder %s165, %s181
      %p183 = scmp.eq.s32.totalorder %s20, 0
      %p184 = por %p182, %p183
      %p185 = scmp.le.s32.totalorder 1, %s14
      %p186 = scmp.lt.s32.totalorder %s14, 5
      %p187 = pnand %p185, %p186
      %p188 = pneg %p187
      // Predicated region
      $region9: #{tpu_custom_call.1} parent=5 // pred_check
        _
      $region10: #{tpu_custom_call.1} parent=5 // pred_check_branch
        %190 = sbr.rel (%p187) target = $region12
      $region11: #{tpu_custom_call.1} parent=5 // pred_region
        %s191 = ssub.s32 %s14, 1
        // Predicated region
        $region13: #{tpu_custom_call.1} parent=11 // pred_check
          %p192 = pneg %p107
        $region14: #{tpu_custom_call.1} parent=11 // pred_check_branch
          %194 = sbr.rel (%p192) target = $region16
        $region15: #{tpu_custom_call.1} parent=11 // pred_region
          _
        $region16: #{tpu_custom_call.1} parent=11 // pred_fallthru
          _
        // Predicated region
        $region17: #{tpu_custom_call.1} parent=11 // pred_check
          %p195 = pneg %p128
        $region18: #{tpu_custom_call.1} parent=11 // pred_check_branch
          %197 = sbr.rel (%p195) target = $region20
        $region19: #{tpu_custom_call.1} parent=11 // pred_region
          _
        $region20: #{tpu_custom_call.1} parent=11 // pred_fallthru
          _
        // Predicated region
        $region21: #{tpu_custom_call.1} parent=11 // pred_check
          %p198 = pneg %p149
        $region22: #{tpu_custom_call.1} parent=11 // pred_check_branch
          %200 = sbr.rel (%p198) target = $region24
        $region23: #{tpu_custom_call.1} parent=11 // pred_region
          _
        $region24: #{tpu_custom_call.1} parent=11 // pred_fallthru
          _
      $region12: #{tpu_custom_call.1} parent=5 // pred_fallthru
        _
      %p201 = scmp.lt.s32.totalorder %s14, 4
      // Predicated region
      $region25: #{tpu_custom_call.1} parent=5 // pred_check
        %p202 = pneg %p201
      $region26: #{tpu_custom_call.1} parent=5 // pred_check_branch
        %204 = sbr.rel (%p202) target = $region28
      $region27: #{tpu_custom_call.1} parent=5 // pred_region
        // Predicated region
        $region29: #{tpu_custom_call.1} parent=27 // pred_check
          %p205 = pneg %p48
        $region30: #{tpu_custom_call.1} parent=27 // pred_check_branch
          %207 = sbr.rel (%p205) target = $region32
        $region31: #{tpu_custom_call.1} parent=27 // pred_region
          %s208 = smul.u32 8, %s22
          %s209 = ssub.s32 18, %s208
          %p210 = scmp.lt.s32.totalorder %s209, 8
          %s211 = scalar_select %p210, %s209, 8
          %s212 = smul.u32 8, %s211
          %s213 = smul.u32 %s212, 3
          %p214 = scmp.lt.s32.totalorder %s21, 1
          %s215 = scalar_select %p214, %s21, 1
          %p216 = scmp.lt.s32.totalorder %s208, 17
          %s217 = scalar_select %p216, %s208, 17
          %s218 = smul.addr %s217, 3
          %s219 = smul.addr %s215, 54
          %s220 = sadd.s32 %s218, %s219
          %s221 = smul.addr %s220, 8
          %s222 = scalar_lea.vmem %s0, %s221
          %s223 = smul.u32 8, %s22
          %s224 = ssub.s32 18, %s223
          %p225 = scmp.lt.s32.totalorder %s224, 8
          %s226 = scalar_select %p225, %s224, 8
          %s227 = smul.u32 8, %s226
          %s228 = smul.u32 %s227, 3
        $region32: #{tpu_custom_call.1} parent=27 // pred_fallthru
          _
        // Predicated region
        $region33: #{tpu_custom_call.1} parent=27 // pred_check
          %p229 = pneg %p80
        $region34: #{tpu_custom_call.1} parent=27 // pred_check_branch
          %231 = sbr.rel (%p229) target = $region36
        $region35: #{tpu_custom_call.1} parent=27 // pred_region
          %s232 = sadd.s32 %s22, 1
          %s233 = smul.u32 %s232, 4
          %s234 = smul.u32 2, %s233
          %p235 = scmp.lt.s32.totalorder %s21, 1
          %s236 = scalar_select %p235, %s21, 1
          %p237 = scmp.lt.s32.totalorder %s234, 17
          %s238 = scalar_select %p237, %s234, 17
          %s239 = smul.addr %s238, 3
          %s240 = smul.addr %s236, 54
          %s241 = sadd.s32 %s239, %s240
          %s242 = smul.addr %s241, 8
          %s243 = scalar_lea.vmem %s1, %s242
          %s244 = sadd.s32 %s22, 1
          %s245 = smul.u32 %s244, 4
          %s246 = smul.u32 2, %s245
        $region36: #{tpu_custom_call.1} parent=27 // pred_fallthru
          _
      $region28: #{tpu_custom_call.1} parent=5 // pred_fallthru
        _
      %p247 = scmp.le.s32.totalorder 1, %s14
      %p248 = scmp.lt.s32.totalorder %s14, 5
      %p249 = pnand %p247, %p248
      %p250 = pneg %p249
      // Predicated region
      $region37: #{tpu_custom_call.1} parent=5 // pred_check
        _
      $region38: #{tpu_custom_call.1} parent=5 // pred_check_branch
        %252 = sbr.rel (%p249) target = $region40
      $region39: #{tpu_custom_call.1} parent=5 // pred_region
        %s253 = ssub.s32 %s14, 1
        %s254 = smul.u32 8, %s24
        %s255 = ssub.s32 18, %s254
        %p256 = scmp.lt.s32.totalorder %s255, 8
        %s257 = scalar_select %p256, %s255, 8
        %s258 = smul.u32 8, %s257
        %s259 = smul.u32 %s258, 3
        %p260 = scmp.lt.s32.totalorder %s23, 1
        %s261 = scalar_select %p260, %s23, 1
        %p262 = scmp.lt.s32.totalorder %s254, 17
        %s263 = scalar_select %p262, %s254, 17
        %s264 = smul.addr %s263, 3
        %s265 = smul.addr %s261, 54
        %s266 = sadd.s32 %s264, %s265
        %s267 = smul.addr %s266, 8
        %s268 = scalar_lea.vmem %s0, %s267
        %p269 = pneg %p54
        %p270 = pneg %p51
        %s271 = sadd.s32 %s24, 1
        %s272 = smul.u32 %s271, 4
        %s273 = smul.u32 2, %s272
        %p274 = scmp.lt.s32.totalorder %s23, 1
        %s275 = scalar_select %p274, %s23, 1
        %p276 = scmp.lt.s32.totalorder %s273, 17
        %s277 = scalar_select %p276, %s273, 17
        %s278 = smul.addr %s277, 3
        %s279 = smul.addr %s275, 54
        %s280 = sadd.s32 %s278, %s279
        %s281 = smul.addr %s280, 8
        %s282 = scalar_lea.vmem %s1, %s281
        %p283 = pneg %p86
        %p284 = pneg %p83
        %p285 = pneg %p107
        %p286 = pneg %p104
        %p287 = pneg %p128
        %p288 = pneg %p125
        %p289 = pneg %p149
        %p290 = pneg %p146
        %p291 = pneg %p177
        %p292 = pneg %p174
        %s293 = sand.u32 %s164, 1
        %s294 = scalar_lea.sflag [#allocation3], %s293
        %s295 = sand.u32 %s164, 1
        %s296 = smul.addr %s295, 256
        %s297 = scalar_lea.vmem [#allocation2], %s296
        %s298 = smul.u32 8, %s24
        %s299 = ssub.s32 18, %s298
        %p300 = scmp.lt.s32.totalorder %s299, 8
        %s301 = scalar_select %p300, %s299, 8
        %s302 = smul.u32 8, %s301
        %s303 = smul.u32 %s302, 3
        %p304 = scmp.lt.s32.totalorder %s23, 1
        %s305 = scalar_select %p304, %s23, 1
        %p306 = scmp.lt.s32.totalorder %s298, 17
        %s307 = scalar_select %p306, %s298, 17
        %s308 = smul.addr %s307, 3
        %s309 = smul.addr %s305, 54
        %s310 = sadd.s32 %s308, %s309
        %s311 = smul.addr %s310, 8
        %s312 = scalar_lea.vmem %s0, %s311
        %s313 = smul.u32 8, %s24
        %s314 = ssub.s32 18, %s313
        %p315 = scmp.lt.s32.totalorder %s314, 8
        %s316 = scalar_select %p315, %s314, 8
        %s317 = smul.u32 8, %s316
        %s318 = smul.u32 %s317, 3
        %s319 = sadd.s32 %s24, 1
        %s320 = smul.u32 %s319, 4
        %s321 = smul.u32 2, %s320
        %p322 = scmp.lt.s32.totalorder %s23, 1
        %s323 = scalar_select %p322, %s23, 1
        %p324 = scmp.lt.s32.totalorder %s321, 17
        %s325 = scalar_select %p324, %s321, 17
        %s326 = smul.addr %s325, 3
        %s327 = smul.addr %s323, 54
        %s328 = sadd.s32 %s326, %s327
        %s329 = smul.addr %s328, 8
        %s330 = scalar_lea.vmem %s1, %s329
        %s331 = sadd.s32 %s24, 1
        %s332 = smul.u32 %s331, 4
        %s333 = smul.u32 2, %s332
        %s334 = smul.u32 8, %s24
        %v335 = vld [vmem:[%s312] sm:$0xff]
        %v336 = vld [vmem:[%s312 + $0x8] sm:$0xff]
        %v337 = vld [vmem:[%s312 + $0x10] sm:$0x3]
        %v338 = vld [vmem:[%s312 + $0x18] sm:$0xff]
        %v339 = vld [vmem:[%s312 + $0x20] sm:$0xff]
        %v340 = vld [vmem:[%s312 + $0x28] sm:$0x3]
        %v341 = vld [vmem:[%s312 + $0x30] sm:$0xff]
        %v342 = vld [vmem:[%s312 + $0x38] sm:$0xff]
        %v343 = vld [vmem:[%s312 + $0x40] sm:$0x3]
        %v344 = vld [vmem:[%s312 + $0x48] sm:$0xff]
        %v345 = vld [vmem:[%s312 + $0x50] sm:$0xff]
        %v346 = vld [vmem:[%s312 + $0x58] sm:$0x3]
        %v347 = vld [vmem:[%s312 + $0x60] sm:$0xff]
        %v348 = vld [vmem:[%s312 + $0x68] sm:$0xff]
        %v349 = vld [vmem:[%s312 + $0x70] sm:$0x3]
        %v350 = vld [vmem:[%s312 + $0x78] sm:$0xff]
        %v351 = vld [vmem:[%s312 + $0x80] sm:$0xff]
        %v352 = vld [vmem:[%s312 + $0x88] sm:$0x3]
        %v353 = vld [vmem:[%s312 + $0x90] sm:$0xff]
        %v354 = vld [vmem:[%s312 + $0x98] sm:$0xff]
        %v355 = vld [vmem:[%s312 + $0xa0] sm:$0x3]
        %v356 = vld [vmem:[%s312 + $0xa8] sm:$0xff]
        %v357 = vld [vmem:[%s312 + $0xb0] sm:$0xff]
        %v358 = vld [vmem:[%s312 + $0xb8] sm:$0x3]
        %v359 = vld [vmem:[%s330] sm:$0xff]
        %v360 = vld [vmem:[%s330 + $0x8] sm:$0xff]
        %v361 = vld [vmem:[%s330 + $0x10] sm:$0x3]
        %v362 = vld [vmem:[%s330 + $0x18] sm:$0xff]
        %v363 = vld [vmem:[%s330 + $0x20] sm:$0xff]
        %v364 = vld [vmem:[%s330 + $0x28] sm:$0x3]
        %vm395 = vcmask 1046528
        %v396 = vrot.slane %v335, 1
        %v397 = vrot.slane %v336, 1
        %v398 = vsel %vm395, %v396, %v397
        %v399 = vrot.slane %v337, 1
        %v400 = vsel %vm395, %v397, %v399
        %v401 = vrot.slane %v338, 1
        %v402 = vrot.slane %v339, 1
        %v403 = vsel %vm395, %v401, %v402
        %v404 = vrot.slane %v340, 1
        %v405 = vsel %vm395, %v402, %v404
        %v406 = vrot.slane %v341, 1
        %v407 = vrot.slane %v342, 1
        %v408 = vsel %vm395, %v406, %v407
        %v409 = vrot.slane %v343, 1
        %v410 = vsel %vm395, %v407, %v409
        %v411 = vrot.slane %v344, 1
        %v412 = vrot.slane %v345, 1
        %v413 = vsel %vm395, %v411, %v412
        %v414 = vrot.slane %v346, 1
        %v415 = vsel %vm395, %v412, %v414
        %v416 = vrot.slane %v347, 1
        %v417 = vrot.slane %v348, 1
        %v418 = vsel %vm395, %v416, %v417
        %v419 = vrot.slane %v349, 1
        %v420 = vsel %vm395, %v417, %v419
        %v421 = vrot.slane %v350, 1
        %v422 = vrot.slane %v351, 1
        %v423 = vsel %vm395, %v421, %v422
        %v424 = vrot.slane %v352, 1
        %v425 = vsel %vm395, %v422, %v424
        %v426 = vrot.slane %v353, 1
        %v427 = vrot.slane %v354, 1
        %v428 = vsel %vm395, %v426, %v427
        %v429 = vrot.slane %v355, 1
        %v430 = vsel %vm395, %v427, %v429
        %v431 = vrot.slane %v356, 1
        %v432 = vrot.slane %v357, 1
        %v433 = vsel %vm395, %v431, %v432
        %v434 = vrot.slane %v358, 1
        %v435 = vsel %vm395, %v432, %v434
        %v436 = vrot.slane %v359, 1
        %v437 = vrot.slane %v360, 1
        %v438 = vsel %vm395, %v436, %v437
        %v439 = vrot.slane %v361, 1
        %v440 = vsel %vm395, %v437, %v439
        %v441 = vrot.slane %v362, 1
        %v442 = vrot.slane %v363, 1
        %v443 = vsel %vm395, %v441, %v442
        %v444 = vrot.slane %v364, 1
        %v445 = vsel %vm395, %v442, %v444
        %vm446 = vcmask 1045504
        %v447 = vrot.slane %v335, 2
        %v448 = vrot.slane %v336, 2
        %v449 = vsel %vm446, %v447, %v448
        %v450 = vrot.slane %v337, 2
        %v451 = vsel %vm446, %v448, %v450
        %v452 = vrot.slane %v338, 2
        %v453 = vrot.slane %v339, 2
        %v454 = vsel %vm446, %v452, %v453
        %v455 = vrot.slane %v340, 2
        %v456 = vsel %vm446, %v453, %v455
        %v457 = vrot.slane %v341, 2
        %v458 = vrot.slane %v342, 2
        %v459 = vsel %vm446, %v457, %v458
        %v460 = vrot.slane %v343, 2
        %v461 = vsel %vm446, %v458, %v460
        %v462 = vrot.slane %v344, 2
        %v463 = vrot.slane %v345, 2
        %v464 = vsel %vm446, %v462, %v463
        %v465 = vrot.slane %v346, 2
        %v466 = vsel %vm446, %v463, %v465
        %v467 = vrot.slane %v347, 2
        %v468 = vrot.slane %v348, 2
        %v469 = vsel %vm446, %v467, %v468
        %v470 = vrot.slane %v349, 2
        %v471 = vsel %vm446, %v468, %v470
        %v472 = vrot.slane %v350, 2
        %v473 = vrot.slane %v351, 2
        %v474 = vsel %vm446, %v472, %v473
        %v475 = vrot.slane %v352, 2
        %v476 = vsel %vm446, %v473, %v475
        %v477 = vrot.slane %v353, 2
        %v478 = vrot.slane %v354, 2
        %v479 = vsel %vm446, %v477, %v478
        %v480 = vrot.slane %v355, 2
        %v481 = vsel %vm446, %v478, %v480
        %v482 = vrot.slane %v356, 2
        %v483 = vrot.slane %v357, 2
        %v484 = vsel %vm446, %v482, %v483
        %v485 = vrot.slane %v358, 2
        %v486 = vsel %vm446, %v483, %v485
        %v487 = vrot.slane %v359, 2
        %v488 = vrot.slane %v360, 2
        %v489 = vsel %vm446, %v487, %v488
        %v490 = vrot.slane %v361, 2
        %v491 = vsel %vm446, %v488, %v490
        %v492 = vrot.slane %v362, 2
        %v493 = vrot.slane %v363, 2
        %v494 = vsel %vm446, %v492, %v493
        %v495 = vrot.slane %v364, 2
        %v496 = vsel %vm446, %v493, %v495
        %v497 = vld [vmem:[%s3] sm:$0x1]
        %v498 = vld [vmem:[%s4] sm:$0x1]
        %v499 = vld [vmem:[%s2] sm:$0xf]
        %s500 = scalar_lea.vmem %s2, 4
        %v501 = vld [vmem:[%s500] sm:$0xf]
        %vm502 = vcmask 31744
        %v503 = vsel %vm502, %v398, 0
        %v505 = vsel %vm502, %v400, 0
        %v507 = vsel %vm502, %v403, 0
        %v509 = vsel %vm502, %v405, 0
        %v511 = vsel %vm502, %v408, 0
        %v513 = vsel %vm502, %v410, 0
        %v515 = vsel %vm502, %v413, 0
        %v517 = vsel %vm502, %v415, 0
        %v519 = vsel %vm502, %v418, 0
        %v521 = vsel %vm502, %v420, 0
        %v523 = vsel %vm502, %v423, 0
        %v525 = vsel %vm502, %v425, 0
        %v527 = vsel %vm502, %v428, 0
        %v529 = vsel %vm502, %v430, 0
        %v531 = vsel %vm502, %v433, 0
        %v533 = vsel %vm502, %v435, 0
        %vm535 = vcmask 1043456
        %v537 = vsel %vm535, %v501, 0
        %539 = vmatpush.msra.mxu0 0.0
        %540 = vmatpush.msra.mxu0 0.0
        %541 = vmatpush.msra.mxu0 0.0
        %542 = vmatpush.msra.mxu0 0.0
        %543 = vmatpush.msra.mxu0 0.0
        %544 = vmatpush.msra.mxu0 0.0
        %545 = vmatpush.msra.mxu0 0.0
        %546 = vmatpush.msra.mxu0 0.0
        %547 = vmatpush.msra.mxu0 0.0
        %548 = vmatpush.msra.mxu0 0.0
        %549 = vmatpush.msra.mxu0 0.0
        %550 = vmatpush.msra.mxu0 0.0
        %551 = vmatpush.msra.mxu0 0.0
        %552 = vmatpush.msra.mxu0 0.0
        %553 = vmatpush.msra.mxu0 0.0
        %554 = vmatpush.msra.mxu0 %v537
        %555 = vmatmul.f32.gmra.mxu0 %v503
        %v556 = vpop.f32.mrf.mxu0
        %v557 = vadd.f32 0.0, %v556
        %558 = vmatmul.f32.gmra.mxu0 %v505
        %v559 = vpop.f32.mrf.mxu0
        %v560 = vadd.f32 0.0, %v559
        %561 = vmatmul.f32.gmra.mxu0 %v507
        %v562 = vpop.f32.mrf.mxu0
        %v563 = vadd.f32 0.0, %v562
        %564 = vmatmul.f32.gmra.mxu0 %v509
        %v565 = vpop.f32.mrf.mxu0
        %v566 = vadd.f32 0.0, %v565
        %567 = vmatmul.f32.gmra.mxu0 %v511
        %v568 = vpop.f32.mrf.mxu0
        %v569 = vadd.f32 0.0, %v568
        %570 = vmatmul.f32.gmra.mxu0 %v513
        %v571 = vpop.f32.mrf.mxu0
        %v572 = vadd.f32 0.0, %v571
        %573 = vmatmul.f32.gmra.mxu0 %v515
        %v574 = vpop.f32.mrf.mxu0
        %v575 = vadd.f32 0.0, %v574
        %576 = vmatmul.f32.gmra.mxu0 %v517
        %v577 = vpop.f32.mrf.mxu0
        %v578 = vadd.f32 0.0, %v577
        %579 = vmatmul.f32.gmra.mxu0 %v519
        %v580 = vpop.f32.mrf.mxu0
        %v581 = vadd.f32 0.0, %v580
        %582 = vmatmul.f32.gmra.mxu0 %v521
        %v583 = vpop.f32.mrf.mxu0
        %v584 = vadd.f32 0.0, %v583
        %585 = vmatmul.f32.gmra.mxu0 %v523
        %v586 = vpop.f32.mrf.mxu0
        %v587 = vadd.f32 0.0, %v586
        %588 = vmatmul.f32.gmra.mxu0 %v525
        %v589 = vpop.f32.mrf.mxu0
        %v590 = vadd.f32 0.0, %v589
        %591 = vmatmul.f32.gmra.mxu0 %v527
        %v592 = vpop.f32.mrf.mxu0
        %v593 = vadd.f32 0.0, %v592
        %594 = vmatmul.f32.gmra.mxu0 %v529
        %v595 = vpop.f32.mrf.mxu0
        %v596 = vadd.f32 0.0, %v595
        %597 = vmatmul.f32.gmra.mxu0 %v531
        %v598 = vpop.f32.mrf.mxu0
        %v599 = vadd.f32 0.0, %v598
        %600 = vmatmul.f32.gmra.mxu0 %v533
        %v601 = vpop.f32.mrf.mxu0
        %v602 = vadd.f32 0.0, %v601
        %603 = vdwg.mxu0
        %v604 = vsel %vm502, %v335, 0
        %v606 = vsel %vm502, %v336, 0
        %v608 = vsel %vm502, %v338, 0
        %v610 = vsel %vm502, %v339, 0
        %v612 = vsel %vm502, %v341, 0
        %v614 = vsel %vm502, %v342, 0
        %v616 = vsel %vm502, %v344, 0
        %v618 = vsel %vm502, %v345, 0
        %v620 = vsel %vm502, %v347, 0
        %v622 = vsel %vm502, %v348, 0
        %v624 = vsel %vm502, %v350, 0
        %v626 = vsel %vm502, %v351, 0
        %v628 = vsel %vm502, %v353, 0
        %v630 = vsel %vm502, %v354, 0
        %v632 = vsel %vm502, %v356, 0
        %v634 = vsel %vm502, %v357, 0
        %v637 = vsel %vm535, %v499, 0
        %639 = vmatpush.msra.mxu0 0.0
        %640 = vmatpush.msra.mxu0 0.0
        %641 = vmatpush.msra.mxu0 0.0
        %642 = vmatpush.msra.mxu0 0.0
        %643 = vmatpush.msra.mxu0 0.0
        %644 = vmatpush.msra.mxu0 0.0
        %645 = vmatpush.msra.mxu0 0.0
        %646 = vmatpush.msra.mxu0 0.0
        %647 = vmatpush.msra.mxu0 0.0
        %648 = vmatpush.msra.mxu0 0.0
        %649 = vmatpush.msra.mxu0 0.0
        %650 = vmatpush.msra.mxu0 0.0
        %651 = vmatpush.msra.mxu0 0.0
        %652 = vmatpush.msra.mxu0 0.0
        %653 = vmatpush.msra.mxu0 0.0
        %654 = vmatpush.msra.mxu0 %v637
        %655 = vmatmul.f32.gmra.mxu0 %v604
        %v656 = vpop.f32.mrf.mxu0
        %v657 = vadd.f32 %v557, %v656
        %658 = vmatmul.f32.gmra.mxu0 %v606
        %v659 = vpop.f32.mrf.mxu0
        %v660 = vadd.f32 %v560, %v659
        %661 = vmatmul.f32.gmra.mxu0 %v608
        %v662 = vpop.f32.mrf.mxu0
        %v663 = vadd.f32 %v563, %v662
        %664 = vmatmul.f32.gmra.mxu0 %v610
        %v665 = vpop.f32.mrf.mxu0
        %v666 = vadd.f32 %v566, %v665
        %667 = vmatmul.f32.gmra.mxu0 %v612
        %v668 = vpop.f32.mrf.mxu0
        %v669 = vadd.f32 %v569, %v668
        %670 = vmatmul.f32.gmra.mxu0 %v614
        %v671 = vpop.f32.mrf.mxu0
        %v672 = vadd.f32 %v572, %v671
        %673 = vmatmul.f32.gmra.mxu0 %v616
        %v674 = vpop.f32.mrf.mxu0
        %v675 = vadd.f32 %v575, %v674
        %676 = vmatmul.f32.gmra.mxu0 %v618
        %v677 = vpop.f32.mrf.mxu0
        %v678 = vadd.f32 %v578, %v677
        %679 = vmatmul.f32.gmra.mxu0 %v620
        %v680 = vpop.f32.mrf.mxu0
        %v681 = vadd.f32 %v581, %v680
        %682 = vmatmul.f32.gmra.mxu0 %v622
        %v683 = vpop.f32.mrf.mxu0
        %v684 = vadd.f32 %v584, %v683
        %685 = vmatmul.f32.gmra.mxu0 %v624
        %v686 = vpop.f32.mrf.mxu0
        %v687 = vadd.f32 %v587, %v686
        %688 = vmatmul.f32.gmra.mxu0 %v626
        %v689 = vpop.f32.mrf.mxu0
        %v690 = vadd.f32 %v590, %v689
        %691 = vmatmul.f32.gmra.mxu0 %v628
        %v692 = vpop.f32.mrf.mxu0
        %v693 = vadd.f32 %v593, %v692
        %694 = vmatmul.f32.gmra.mxu0 %v630
        %v695 = vpop.f32.mrf.mxu0
        %v696 = vadd.f32 %v596, %v695
        %697 = vmatmul.f32.gmra.mxu0 %v632
        %v698 = vpop.f32.mrf.mxu0
        %v699 = vadd.f32 %v599, %v698
        %700 = vmatmul.f32.gmra.mxu0 %v634
        %v701 = vpop.f32.mrf.mxu0
        %v702 = vadd.f32 %v602, %v701
        %703 = vdwg.mxu0
        %s704 = scalar_lea.vmem %s2, 8
        %v705 = vld [vmem:[%s704] sm:$0xf]
        %v706 = vsel %vm502, %v359, 0
        %v708 = vsel %vm502, %v360, 0
        %v711 = vsel %vm535, %v705, 0
        %713 = vmatpush.msra.mxu0 0.0
        %714 = vmatpush.msra.mxu0 0.0
        %715 = vmatpush.msra.mxu0 0.0
        %716 = vmatpush.msra.mxu0 0.0
        %717 = vmatpush.msra.mxu0 0.0
        %718 = vmatpush.msra.mxu0 0.0
        %719 = vmatpush.msra.mxu0 0.0
        %720 = vmatpush.msra.mxu0 0.0
        %721 = vmatpush.msra.mxu0 0.0
        %722 = vmatpush.msra.mxu0 0.0
        %723 = vmatpush.msra.mxu0 0.0
        %724 = vmatpush.msra.mxu0 0.0
        %725 = vmatpush.msra.mxu0 0.0
        %726 = vmatpush.msra.mxu0 0.0
        %727 = vmatpush.msra.mxu0 0.0
        %728 = vmatpush.msra.mxu0 %v711
        %729 = vmatmul.f32.gmra.mxu0 %v608
        %v730 = vpop.f32.mrf.mxu0
        %v731 = vadd.f32 0.0, %v730
        %732 = vmatmul.f32.gmra.mxu0 %v610
        %v733 = vpop.f32.mrf.mxu0
        %v734 = vadd.f32 0.0, %v733
        %735 = vmatmul.f32.gmra.mxu0 %v612
        %v736 = vpop.f32.mrf.mxu0
        %v737 = vadd.f32 0.0, %v736
        %738 = vmatmul.f32.gmra.mxu0 %v614
        %v739 = vpop.f32.mrf.mxu0
        %v740 = vadd.f32 0.0, %v739
        %741 = vmatmul.f32.gmra.mxu0 %v616
        %v742 = vpop.f32.mrf.mxu0
        %v743 = vadd.f32 0.0, %v742
        %744 = vmatmul.f32.gmra.mxu0 %v618
        %v745 = vpop.f32.mrf.mxu0
        %v746 = vadd.f32 0.0, %v745
        %747 = vmatmul.f32.gmra.mxu0 %v620
        %v748 = vpop.f32.mrf.mxu0
        %v749 = vadd.f32 0.0, %v748
        %750 = vmatmul.f32.gmra.mxu0 %v622
        %v751 = vpop.f32.mrf.mxu0
        %v752 = vadd.f32 0.0, %v751
        %753 = vmatmul.f32.gmra.mxu0 %v624
        %v754 = vpop.f32.mrf.mxu0
        %v755 = vadd.f32 0.0, %v754
        %756 = vmatmul.f32.gmra.mxu0 %v626
        %v757 = vpop.f32.mrf.mxu0
        %v758 = vadd.f32 0.0, %v757
        %759 = vmatmul.f32.gmra.mxu0 %v628
        %v760 = vpop.f32.mrf.mxu0
        %v761 = vadd.f32 0.0, %v760
        %762 = vmatmul.f32.gmra.mxu0 %v630
        %v763 = vpop.f32.mrf.mxu0
        %v764 = vadd.f32 0.0, %v763
        %765 = vmatmul.f32.gmra.mxu0 %v632
        %v766 = vpop.f32.mrf.mxu0
        %v767 = vadd.f32 0.0, %v766
        %768 = vmatmul.f32.gmra.mxu0 %v634
        %v769 = vpop.f32.mrf.mxu0
        %v770 = vadd.f32 0.0, %v769
        %771 = vmatmul.f32.gmra.mxu0 %v706
        %v772 = vpop.f32.mrf.mxu0
        %v773 = vadd.f32 0.0, %v772
        %774 = vmatmul.f32.gmra.mxu0 %v708
        %v775 = vpop.f32.mrf.mxu0
        %v776 = vadd.f32 0.0, %v775
        %777 = vdwg.mxu0
        %v778 = vadd.f32 %v657, %v731
        %v779 = vadd.f32 %v660, %v734
        %v780 = vadd.f32 %v663, %v737
        %v781 = vadd.f32 %v666, %v740
        %v782 = vadd.f32 %v669, %v743
        %v783 = vadd.f32 %v672, %v746
        %v784 = vadd.f32 %v675, %v749
        %v785 = vadd.f32 %v678, %v752
        %v786 = vadd.f32 %v681, %v755
        %v787 = vadd.f32 %v684, %v758
        %v788 = vadd.f32 %v687, %v761
        %v789 = vadd.f32 %v690, %v764
        %v790 = vadd.f32 %v693, %v767
        %v791 = vadd.f32 %v696, %v770
        %v792 = vadd.f32 %v699, %v773
        %v793 = vadd.f32 %v702, %v776
        %s794 = scalar_lea.vmem %s2, 12
        %v795 = vld [vmem:[%s794] sm:$0xf]
        %v796 = vsel %vm502, %v438, 0
        %v798 = vsel %vm502, %v440, 0
        %v801 = vsel %vm535, %v795, 0
        %803 = vmatpush.msra.mxu0 0.0
        %804 = vmatpush.msra.mxu0 0.0
        %805 = vmatpush.msra.mxu0 0.0
        %806 = vmatpush.msra.mxu0 0.0
        %807 = vmatpush.msra.mxu0 0.0
        %808 = vmatpush.msra.mxu0 0.0
        %809 = vmatpush.msra.mxu0 0.0
        %810 = vmatpush.msra.mxu0 0.0
        %811 = vmatpush.msra.mxu0 0.0
        %812 = vmatpush.msra.mxu0 0.0
        %813 = vmatpush.msra.mxu0 0.0
        %814 = vmatpush.msra.mxu0 0.0
        %815 = vmatpush.msra.mxu0 0.0
        %816 = vmatpush.msra.mxu0 0.0
        %817 = vmatpush.msra.mxu0 0.0
        %818 = vmatpush.msra.mxu0 %v801
        %819 = vmatmul.f32.gmra.mxu0 %v507
        %v820 = vpop.f32.mrf.mxu0
        %v821 = vadd.f32 0.0, %v820
        %822 = vmatmul.f32.gmra.mxu0 %v509
        %v823 = vpop.f32.mrf.mxu0
        %v824 = vadd.f32 0.0, %v823
        %825 = vmatmul.f32.gmra.mxu0 %v511
        %v826 = vpop.f32.mrf.mxu0
        %v827 = vadd.f32 0.0, %v826
        %828 = vmatmul.f32.gmra.mxu0 %v513
        %v829 = vpop.f32.mrf.mxu0
        %v830 = vadd.f32 0.0, %v829
        %831 = vmatmul.f32.gmra.mxu0 %v515
        %v832 = vpop.f32.mrf.mxu0
        %v833 = vadd.f32 0.0, %v832
        %834 = vmatmul.f32.gmra.mxu0 %v517
        %v835 = vpop.f32.mrf.mxu0
        %v836 = vadd.f32 0.0, %v835
        %837 = vmatmul.f32.gmra.mxu0 %v519
        %v838 = vpop.f32.mrf.mxu0
        %v839 = vadd.f32 0.0, %v838
        %840 = vmatmul.f32.gmra.mxu0 %v521
        %v841 = vpop.f32.mrf.mxu0
        %v842 = vadd.f32 0.0, %v841
        %843 = vmatmul.f32.gmra.mxu0 %v523
        %v844 = vpop.f32.mrf.mxu0
        %v845 = vadd.f32 0.0, %v844
        %846 = vmatmul.f32.gmra.mxu0 %v525
        %v847 = vpop.f32.mrf.mxu0
        %v848 = vadd.f32 0.0, %v847
        %849 = vmatmul.f32.gmra.mxu0 %v527
        %v850 = vpop.f32.mrf.mxu0
        %v851 = vadd.f32 0.0, %v850
        %852 = vmatmul.f32.gmra.mxu0 %v529
        %v853 = vpop.f32.mrf.mxu0
        %v854 = vadd.f32 0.0, %v853
        %855 = vmatmul.f32.gmra.mxu0 %v531
        %v856 = vpop.f32.mrf.mxu0
        %v857 = vadd.f32 0.0, %v856
        %858 = vmatmul.f32.gmra.mxu0 %v533
        %v859 = vpop.f32.mrf.mxu0
        %v860 = vadd.f32 0.0, %v859
        %861 = vmatmul.f32.gmra.mxu0 %v796
        %v862 = vpop.f32.mrf.mxu0
        %v863 = vadd.f32 0.0, %v862
        %864 = vmatmul.f32.gmra.mxu0 %v798
        %v865 = vpop.f32.mrf.mxu0
        %v866 = vadd.f32 0.0, %v865
        %867 = vdwg.mxu0
        %v868 = vadd.f32 %v778, %v821
        %v869 = vadd.f32 %v779, %v824
        %v870 = vadd.f32 %v780, %v827
        %v871 = vadd.f32 %v781, %v830
        %v872 = vadd.f32 %v782, %v833
        %v873 = vadd.f32 %v783, %v836
        %v874 = vadd.f32 %v784, %v839
        %v875 = vadd.f32 %v785, %v842
        %v876 = vadd.f32 %v786, %v845
        %v877 = vadd.f32 %v787, %v848
        %v878 = vadd.f32 %v788, %v851
        %v879 = vadd.f32 %v789, %v854
        %v880 = vadd.f32 %v790, %v857
        %v881 = vadd.f32 %v791, %v860
        %v882 = vadd.f32 %v792, %v863
        %v883 = vadd.f32 %v793, %v866
        %v885 = vperm.slane %v497, 0
        %v887 = vmul.f32 %v868, %v885
        %v888 = vmul.f32 %v869, %v885
        %v889 = vmul.f32 %v870, %v885
        %v890 = vmul.f32 %v871, %v885
        %v891 = vmul.f32 %v872, %v885
        %v892 = vmul.f32 %v873, %v885
        %v893 = vmul.f32 %v874, %v885
        %v894 = vmul.f32 %v875, %v885
        %v895 = vmul.f32 %v876, %v885
        %v896 = vmul.f32 %v877, %v885
        %v897 = vmul.f32 %v878, %v885
        %v898 = vmul.f32 %v879, %v885
        %v899 = vmul.f32 %v880, %v885
        %v900 = vmul.f32 %v881, %v885
        %v901 = vmul.f32 %v882, %v885
        %v902 = vmul.f32 %v883, %v885
        %v904 = vperm.slane %v498, 0
        %v906 = vadd.f32 %v887, %v904
        %v907 = vadd.f32 %v888, %v904
        %v908 = vadd.f32 %v889, %v904
        %v909 = vadd.f32 %v890, %v904
        %v910 = vadd.f32 %v891, %v904
        %v911 = vadd.f32 %v892, %v904
        %v912 = vadd.f32 %v893, %v904
        %v913 = vadd.f32 %v894, %v904
        %v914 = vadd.f32 %v895, %v904
        %v915 = vadd.f32 %v896, %v904
        %v916 = vadd.f32 %v897, %v904
        %v917 = vadd.f32 %v898, %v904
        %v918 = vadd.f32 %v899, %v904
        %v919 = vadd.f32 %v900, %v904
        %v920 = vadd.f32 %v901, %v904
        %v921 = vadd.f32 %v902, %v904
        %v922 = vmax.f32 %v906, 0.0
        %v923 = vmax.f32 %v907, 0.0
        %v924 = vmax.f32 %v908, 0.0
        %v925 = vmax.f32 %v909, 0.0
        %v926 = vmax.f32 %v910, 0.0
        %v927 = vmax.f32 %v911, 0.0
        %v928 = vmax.f32 %v912, 0.0
        %v929 = vmax.f32 %v913, 0.0
        %v930 = vmax.f32 %v914, 0.0
        %v931 = vmax.f32 %v915, 0.0
        %v932 = vmax.f32 %v916, 0.0
        %v933 = vmax.f32 %v917, 0.0
        %v934 = vmax.f32 %v918, 0.0
        %v935 = vmax.f32 %v919, 0.0
        %v936 = vmax.f32 %v920, 0.0
        %v937 = vmax.f32 %v921, 0.0
        %s938 = scalar_lea.vmem %s2, 16
        %v939 = vld [vmem:[%s938] sm:$0xf]
        %s940 = scalar_lea.vmem %s2, 20
        %v941 = vld [vmem:[%s940] sm:$0xf]
        %v942 = vsel %vm502, %v449, 0
        %v944 = vsel %vm502, %v451, 0
        %v946 = vsel %vm502, %v454, 0
        %v948 = vsel %vm502, %v456, 0
        %v950 = vsel %vm502, %v459, 0
        %v952 = vsel %vm502, %v461, 0
        %v954 = vsel %vm502, %v464, 0
        %v956 = vsel %vm502, %v466, 0
        %v958 = vsel %vm502, %v469, 0
        %v960 = vsel %vm502, %v471, 0
        %v962 = vsel %vm502, %v474, 0
        %v964 = vsel %vm502, %v476, 0
        %v966 = vsel %vm502, %v479, 0
        %v968 = vsel %vm502, %v481, 0
        %v970 = vsel %vm502, %v484, 0
        %v972 = vsel %vm502, %v486, 0
        %v975 = vsel %vm535, %v941, 0
        %977 = vmatpush.msra.mxu0 0.0
        %978 = vmatpush.msra.mxu0 0.0
        %979 = vmatpush.msra.mxu0 0.0
        %980 = vmatpush.msra.mxu0 0.0
        %981 = vmatpush.msra.mxu0 0.0
        %982 = vmatpush.msra.mxu0 0.0
        %983 = vmatpush.msra.mxu0 0.0
        %984 = vmatpush.msra.mxu0 0.0
        %985 = vmatpush.msra.mxu0 0.0
        %986 = vmatpush.msra.mxu0 0.0
        %987 = vmatpush.msra.mxu0 0.0
        %988 = vmatpush.msra.mxu0 0.0
        %989 = vmatpush.msra.mxu0 0.0
        %990 = vmatpush.msra.mxu0 0.0
        %991 = vmatpush.msra.mxu0 0.0
        %992 = vmatpush.msra.mxu0 %v975
        %993 = vmatmul.f32.gmra.mxu0 %v942
        %v994 = vpop.f32.mrf.mxu0
        %v995 = vadd.f32 0.0, %v994
        %996 = vmatmul.f32.gmra.mxu0 %v944
        %v997 = vpop.f32.mrf.mxu0
        %v998 = vadd.f32 0.0, %v997
        %999 = vmatmul.f32.gmra.mxu0 %v946
        %v1000 = vpop.f32.mrf.mxu0
        %v1001 = vadd.f32 0.0, %v1000
        %1002 = vmatmul.f32.gmra.mxu0 %v948
        %v1003 = vpop.f32.mrf.mxu0
        %v1004 = vadd.f32 0.0, %v1003
        %1005 = vmatmul.f32.gmra.mxu0 %v950
        %v1006 = vpop.f32.mrf.mxu0
        %v1007 = vadd.f32 0.0, %v1006
        %1008 = vmatmul.f32.gmra.mxu0 %v952
        %v1009 = vpop.f32.mrf.mxu0
        %v1010 = vadd.f32 0.0, %v1009
        %1011 = vmatmul.f32.gmra.mxu0 %v954
        %v1012 = vpop.f32.mrf.mxu0
        %v1013 = vadd.f32 0.0, %v1012
        %1014 = vmatmul.f32.gmra.mxu0 %v956
        %v1015 = vpop.f32.mrf.mxu0
        %v1016 = vadd.f32 0.0, %v1015
        %1017 = vmatmul.f32.gmra.mxu0 %v958
        %v1018 = vpop.f32.mrf.mxu0
        %v1019 = vadd.f32 0.0, %v1018
        %1020 = vmatmul.f32.gmra.mxu0 %v960
        %v1021 = vpop.f32.mrf.mxu0
        %v1022 = vadd.f32 0.0, %v1021
        %1023 = vmatmul.f32.gmra.mxu0 %v962
        %v1024 = vpop.f32.mrf.mxu0
        %v1025 = vadd.f32 0.0, %v1024
        %1026 = vmatmul.f32.gmra.mxu0 %v964
        %v1027 = vpop.f32.mrf.mxu0
        %v1028 = vadd.f32 0.0, %v1027
        %1029 = vmatmul.f32.gmra.mxu0 %v966
        %v1030 = vpop.f32.mrf.mxu0
        %v1031 = vadd.f32 0.0, %v1030
        %1032 = vmatmul.f32.gmra.mxu0 %v968
        %v1033 = vpop.f32.mrf.mxu0
        %v1034 = vadd.f32 0.0, %v1033
        %1035 = vmatmul.f32.gmra.mxu0 %v970
        %v1036 = vpop.f32.mrf.mxu0
        %v1037 = vadd.f32 0.0, %v1036
        %1038 = vmatmul.f32.gmra.mxu0 %v972
        %v1039 = vpop.f32.mrf.mxu0
        %v1040 = vadd.f32 0.0, %v1039
        %1041 = vdwg.mxu0
        %v1043 = vsel %vm535, %v939, 0
        %1045 = vmatpush.msra.mxu0 0.0
        %1046 = vmatpush.msra.mxu0 0.0
        %1047 = vmatpush.msra.mxu0 0.0
        %1048 = vmatpush.msra.mxu0 0.0
        %1049 = vmatpush.msra.mxu0 0.0
        %1050 = vmatpush.msra.mxu0 0.0
        %1051 = vmatpush.msra.mxu0 0.0
        %1052 = vmatpush.msra.mxu0 0.0
        %1053 = vmatpush.msra.mxu0 0.0
        %1054 = vmatpush.msra.mxu0 0.0
        %1055 = vmatpush.msra.mxu0 0.0
        %1056 = vmatpush.msra.mxu0 0.0
        %1057 = vmatpush.msra.mxu0 0.0
        %1058 = vmatpush.msra.mxu0 0.0
        %1059 = vmatpush.msra.mxu0 0.0
        %1060 = vmatpush.msra.mxu0 %v1043
        %1061 = vmatmul.f32.gmra.mxu0 %v503
        %v1062 = vpop.f32.mrf.mxu0
        %v1063 = vadd.f32 %v995, %v1062
        %1064 = vmatmul.f32.gmra.mxu0 %v505
        %v1065 = vpop.f32.mrf.mxu0
        %v1066 = vadd.f32 %v998, %v1065
        %1067 = vmatmul.f32.gmra.mxu0 %v507
        %v1068 = vpop.f32.mrf.mxu0
        %v1069 = vadd.f32 %v1001, %v1068
        %1070 = vmatmul.f32.gmra.mxu0 %v509
        %v1071 = vpop.f32.mrf.mxu0
        %v1072 = vadd.f32 %v1004, %v1071
        %1073 = vmatmul.f32.gmra.mxu0 %v511
        %v1074 = vpop.f32.mrf.mxu0
        %v1075 = vadd.f32 %v1007, %v1074
        %1076 = vmatmul.f32.gmra.mxu0 %v513
        %v1077 = vpop.f32.mrf.mxu0
        %v1078 = vadd.f32 %v1010, %v1077
        %1079 = vmatmul.f32.gmra.mxu0 %v515
        %v1080 = vpop.f32.mrf.mxu0
        %v1081 = vadd.f32 %v1013, %v1080
        %1082 = vmatmul.f32.gmra.mxu0 %v517
        %v1083 = vpop.f32.mrf.mxu0
        %v1084 = vadd.f32 %v1016, %v1083
        %1085 = vmatmul.f32.gmra.mxu0 %v519
        %v1086 = vpop.f32.mrf.mxu0
        %v1087 = vadd.f32 %v1019, %v1086
        %1088 = vmatmul.f32.gmra.mxu0 %v521
        %v1089 = vpop.f32.mrf.mxu0
        %v1090 = vadd.f32 %v1022, %v1089
        %1091 = vmatmul.f32.gmra.mxu0 %v523
        %v1092 = vpop.f32.mrf.mxu0
        %v1093 = vadd.f32 %v1025, %v1092
        %1094 = vmatmul.f32.gmra.mxu0 %v525
        %v1095 = vpop.f32.mrf.mxu0
        %v1096 = vadd.f32 %v1028, %v1095
        %1097 = vmatmul.f32.gmra.mxu0 %v527
        %v1098 = vpop.f32.mrf.mxu0
        %v1099 = vadd.f32 %v1031, %v1098
        %1100 = vmatmul.f32.gmra.mxu0 %v529
        %v1101 = vpop.f32.mrf.mxu0
        %v1102 = vadd.f32 %v1034, %v1101
        %1103 = vmatmul.f32.gmra.mxu0 %v531
        %v1104 = vpop.f32.mrf.mxu0
        %v1105 = vadd.f32 %v1037, %v1104
        %1106 = vmatmul.f32.gmra.mxu0 %v533
        %v1107 = vpop.f32.mrf.mxu0
        %v1108 = vadd.f32 %v1040, %v1107
        %1109 = vdwg.mxu0
        %s1110 = scalar_lea.vmem %s2, 24
        %v1111 = vld [vmem:[%s1110] sm:$0xf]
        %v1113 = vsel %vm535, %v1111, 0
        %1115 = vmatpush.msra.mxu0 0.0
        %1116 = vmatpush.msra.mxu0 0.0
        %1117 = vmatpush.msra.mxu0 0.0
        %1118 = vmatpush.msra.mxu0 0.0
        %1119 = vmatpush.msra.mxu0 0.0
        %1120 = vmatpush.msra.mxu0 0.0
        %1121 = vmatpush.msra.mxu0 0.0
        %1122 = vmatpush.msra.mxu0 0.0
        %1123 = vmatpush.msra.mxu0 0.0
        %1124 = vmatpush.msra.mxu0 0.0
        %1125 = vmatpush.msra.mxu0 0.0
        %1126 = vmatpush.msra.mxu0 0.0
        %1127 = vmatpush.msra.mxu0 0.0
        %1128 = vmatpush.msra.mxu0 0.0
        %1129 = vmatpush.msra.mxu0 0.0
        %1130 = vmatpush.msra.mxu0 %v1113
        %1131 = vmatmul.f32.gmra.mxu0 %v507
        %v1132 = vpop.f32.mrf.mxu0
        %v1133 = vadd.f32 0.0, %v1132
        %1134 = vmatmul.f32.gmra.mxu0 %v509
        %v1135 = vpop.f32.mrf.mxu0
        %v1136 = vadd.f32 0.0, %v1135
        %1137 = vmatmul.f32.gmra.mxu0 %v511
        %v1138 = vpop.f32.mrf.mxu0
        %v1139 = vadd.f32 0.0, %v1138
        %1140 = vmatmul.f32.gmra.mxu0 %v513
        %v1141 = vpop.f32.mrf.mxu0
        %v1142 = vadd.f32 0.0, %v1141
        %1143 = vmatmul.f32.gmra.mxu0 %v515
        %v1144 = vpop.f32.mrf.mxu0
        %v1145 = vadd.f32 0.0, %v1144
        %1146 = vmatmul.f32.gmra.mxu0 %v517
        %v1147 = vpop.f32.mrf.mxu0
        %v1148 = vadd.f32 0.0, %v1147
        %1149 = vmatmul.f32.gmra.mxu0 %v519
        %v1150 = vpop.f32.mrf.mxu0
        %v1151 = vadd.f32 0.0, %v1150
        %1152 = vmatmul.f32.gmra.mxu0 %v521
        %v1153 = vpop.f32.mrf.mxu0
        %v1154 = vadd.f32 0.0, %v1153
        %1155 = vmatmul.f32.gmra.mxu0 %v523
        %v1156 = vpop.f32.mrf.mxu0
        %v1157 = vadd.f32 0.0, %v1156
        %1158 = vmatmul.f32.gmra.mxu0 %v525
        %v1159 = vpop.f32.mrf.mxu0
        %v1160 = vadd.f32 0.0, %v1159
        %1161 = vmatmul.f32.gmra.mxu0 %v527
        %v1162 = vpop.f32.mrf.mxu0
        %v1163 = vadd.f32 0.0, %v1162
        %1164 = vmatmul.f32.gmra.mxu0 %v529
        %v1165 = vpop.f32.mrf.mxu0
        %v1166 = vadd.f32 0.0, %v1165
        %1167 = vmatmul.f32.gmra.mxu0 %v531
        %v1168 = vpop.f32.mrf.mxu0
        %v1169 = vadd.f32 0.0, %v1168
        %1170 = vmatmul.f32.gmra.mxu0 %v533
        %v1171 = vpop.f32.mrf.mxu0
        %v1172 = vadd.f32 0.0, %v1171
        %1173 = vmatmul.f32.gmra.mxu0 %v796
        %v1174 = vpop.f32.mrf.mxu0
        %v1175 = vadd.f32 0.0, %v1174
        %1176 = vmatmul.f32.gmra.mxu0 %v798
        %v1177 = vpop.f32.mrf.mxu0
        %v1178 = vadd.f32 0.0, %v1177
        %1179 = vdwg.mxu0
        %v1180 = vadd.f32 %v1063, %v1133
        %v1181 = vadd.f32 %v1066, %v1136
        %v1182 = vadd.f32 %v1069, %v1139
        %v1183 = vadd.f32 %v1072, %v1142
        %v1184 = vadd.f32 %v1075, %v1145
        %v1185 = vadd.f32 %v1078, %v1148
        %v1186 = vadd.f32 %v1081, %v1151
        %v1187 = vadd.f32 %v1084, %v1154
        %v1188 = vadd.f32 %v1087, %v1157
        %v1189 = vadd.f32 %v1090, %v1160
        %v1190 = vadd.f32 %v1093, %v1163
        %v1191 = vadd.f32 %v1096, %v1166
        %v1192 = vadd.f32 %v1099, %v1169
        %v1193 = vadd.f32 %v1102, %v1172
        %v1194 = vadd.f32 %v1105, %v1175
        %v1195 = vadd.f32 %v1108, %v1178
        %s1196 = scalar_lea.vmem %s2, 28
        %v1197 = vld [vmem:[%s1196] sm:$0xf]
        %v1198 = vsel %vm502, %v489, 0
        %v1200 = vsel %vm502, %v491, 0
        %v1203 = vsel %vm535, %v1197, 0
        %1205 = vmatpush.msra.mxu0 0.0
        %1206 = vmatpush.msra.mxu0 0.0
        %1207 = vmatpush.msra.mxu0 0.0
        %1208 = vmatpush.msra.mxu0 0.0
        %1209 = vmatpush.msra.mxu0 0.0
        %1210 = vmatpush.msra.mxu0 0.0
        %1211 = vmatpush.msra.mxu0 0.0
        %1212 = vmatpush.msra.mxu0 0.0
        %1213 = vmatpush.msra.mxu0 0.0
        %1214 = vmatpush.msra.mxu0 0.0
        %1215 = vmatpush.msra.mxu0 0.0
        %1216 = vmatpush.msra.mxu0 0.0
        %1217 = vmatpush.msra.mxu0 0.0
        %1218 = vmatpush.msra.mxu0 0.0
        %1219 = vmatpush.msra.mxu0 0.0
        %1220 = vmatpush.msra.mxu0 %v1203
        %1221 = vmatmul.f32.gmra.mxu0 %v946
        %v1222 = vpop.f32.mrf.mxu0
        %v1223 = vadd.f32 0.0, %v1222
        %1224 = vmatmul.f32.gmra.mxu0 %v948
        %v1225 = vpop.f32.mrf.mxu0
        %v1226 = vadd.f32 0.0, %v1225
        %1227 = vmatmul.f32.gmra.mxu0 %v950
        %v1228 = vpop.f32.mrf.mxu0
        %v1229 = vadd.f32 0.0, %v1228
        %1230 = vmatmul.f32.gmra.mxu0 %v952
        %v1231 = vpop.f32.mrf.mxu0
        %v1232 = vadd.f32 0.0, %v1231
        %1233 = vmatmul.f32.gmra.mxu0 %v954
        %v1234 = vpop.f32.mrf.mxu0
        %v1235 = vadd.f32 0.0, %v1234
        %1236 = vmatmul.f32.gmra.mxu0 %v956
        %v1237 = vpop.f32.mrf.mxu0
        %v1238 = vadd.f32 0.0, %v1237
        %1239 = vmatmul.f32.gmra.mxu0 %v958
        %v1240 = vpop.f32.mrf.mxu0
        %v1241 = vadd.f32 0.0, %v1240
        %1242 = vmatmul.f32.gmra.mxu0 %v960
        %v1243 = vpop.f32.mrf.mxu0
        %v1244 = vadd.f32 0.0, %v1243
        %1245 = vmatmul.f32.gmra.mxu0 %v962
        %v1246 = vpop.f32.mrf.mxu0
        %v1247 = vadd.f32 0.0, %v1246
        %1248 = vmatmul.f32.gmra.mxu0 %v964
        %v1249 = vpop.f32.mrf.mxu0
        %v1250 = vadd.f32 0.0, %v1249
        %1251 = vmatmul.f32.gmra.mxu0 %v966
        %v1252 = vpop.f32.mrf.mxu0
        %v1253 = vadd.f32 0.0, %v1252
        %1254 = vmatmul.f32.gmra.mxu0 %v968
        %v1255 = vpop.f32.mrf.mxu0
        %v1256 = vadd.f32 0.0, %v1255
        %1257 = vmatmul.f32.gmra.mxu0 %v970
        %v1258 = vpop.f32.mrf.mxu0
        %v1259 = vadd.f32 0.0, %v1258
        %1260 = vmatmul.f32.gmra.mxu0 %v972
        %v1261 = vpop.f32.mrf.mxu0
        %v1262 = vadd.f32 0.0, %v1261
        %1263 = vmatmul.f32.gmra.mxu0 %v1198
        %v1264 = vpop.f32.mrf.mxu0
        %v1265 = vadd.f32 0.0, %v1264
        %1266 = vmatmul.f32.gmra.mxu0 %v1200
        %v1267 = vpop.f32.mrf.mxu0
        %v1268 = vadd.f32 0.0, %v1267
        %1269 = vdwg.mxu0
        %v1270 = vadd.f32 %v1180, %v1223
        %v1271 = vadd.f32 %v1181, %v1226
        %v1272 = vadd.f32 %v1182, %v1229
        %v1273 = vadd.f32 %v1183, %v1232
        %v1274 = vadd.f32 %v1184, %v1235
        %v1275 = vadd.f32 %v1185, %v1238
        %v1276 = vadd.f32 %v1186, %v1241
        %v1277 = vadd.f32 %v1187, %v1244
        %v1278 = vadd.f32 %v1188, %v1247
        %v1279 = vadd.f32 %v1189, %v1250
        %v1280 = vadd.f32 %v1190, %v1253
        %v1281 = vadd.f32 %v1191, %v1256
        %v1282 = vadd.f32 %v1192, %v1259
        %v1283 = vadd.f32 %v1193, %v1262
        %v1284 = vadd.f32 %v1194, %v1265
        %v1285 = vadd.f32 %v1195, %v1268
        %v1286 = vmul.f32 %v1270, %v885
        %v1287 = vmul.f32 %v1271, %v885
        %v1288 = vmul.f32 %v1272, %v885
        %v1289 = vmul.f32 %v1273, %v885
        %v1290 = vmul.f32 %v1274, %v885
        %v1291 = vmul.f32 %v1275, %v885
        %v1292 = vmul.f32 %v1276, %v885
        %v1293 = vmul.f32 %v1277, %v885
        %v1294 = vmul.f32 %v1278, %v885
        %v1295 = vmul.f32 %v1279, %v885
        %v1296 = vmul.f32 %v1280, %v885
        %v1297 = vmul.f32 %v1281, %v885
        %v1298 = vmul.f32 %v1282, %v885
        %v1299 = vmul.f32 %v1283, %v885
        %v1300 = vmul.f32 %v1284, %v885
        %v1301 = vmul.f32 %v1285, %v885
        %v1302 = vadd.f32 %v1286, %v904
        %v1303 = vadd.f32 %v1287, %v904
        %v1304 = vadd.f32 %v1288, %v904
        %v1305 = vadd.f32 %v1289, %v904
        %v1306 = vadd.f32 %v1290, %v904
        %v1307 = vadd.f32 %v1291, %v904
        %v1308 = vadd.f32 %v1292, %v904
        %v1309 = vadd.f32 %v1293, %v904
        %v1310 = vadd.f32 %v1294, %v904
        %v1311 = vadd.f32 %v1295, %v904
        %v1312 = vadd.f32 %v1296, %v904
        %v1313 = vadd.f32 %v1297, %v904
        %v1314 = vadd.f32 %v1298, %v904
        %v1315 = vadd.f32 %v1299, %v904
        %v1316 = vadd.f32 %v1300, %v904
        %v1317 = vadd.f32 %v1301, %v904
        %v1318 = vmax.f32 %v1302, 0.0
        %v1319 = vmax.f32 %v1303, 0.0
        %v1320 = vmax.f32 %v1304, 0.0
        %v1321 = vmax.f32 %v1305, 0.0
        %v1322 = vmax.f32 %v1306, 0.0
        %v1323 = vmax.f32 %v1307, 0.0
        %v1324 = vmax.f32 %v1308, 0.0
        %v1325 = vmax.f32 %v1309, 0.0
        %v1326 = vmax.f32 %v1310, 0.0
        %v1327 = vmax.f32 %v1311, 0.0
        %v1328 = vmax.f32 %v1312, 0.0
        %v1329 = vmax.f32 %v1313, 0.0
        %v1330 = vmax.f32 %v1314, 0.0
        %v1331 = vmax.f32 %v1315, 0.0
        %v1332 = vmax.f32 %v1316, 0.0
        %v1333 = vmax.f32 %v1317, 0.0
        %1350 = vrot.lane.b32.xlu0 %v1318, 8
        %v1351 = vpop.permute.xlu0 %1350
        %1352 = vrot.lane.b32.xlu0 %v1319, 8
        %v1353 = vpop.permute.xlu0 %1352
        %1354 = vrot.lane.b32.xlu0 %v1320, 8
        %v1355 = vpop.permute.xlu0 %1354
        %1356 = vrot.lane.b32.xlu0 %v1321, 8
        %v1357 = vpop.permute.xlu0 %1356
        %1358 = vrot.lane.b32.xlu0 %v1322, 8
        %v1359 = vpop.permute.xlu0 %1358
        %1360 = vrot.lane.b32.xlu0 %v1323, 8
        %v1361 = vpop.permute.xlu0 %1360
        %1362 = vrot.lane.b32.xlu0 %v1324, 8
        %v1363 = vpop.permute.xlu0 %1362
        %1364 = vrot.lane.b32.xlu0 %v1325, 8
        %v1365 = vpop.permute.xlu0 %1364
        %1366 = vrot.lane.b32.xlu0 %v1326, 8
        %v1367 = vpop.permute.xlu0 %1366
        %1368 = vrot.lane.b32.xlu0 %v1327, 8
        %v1369 = vpop.permute.xlu0 %1368
        %1370 = vrot.lane.b32.xlu0 %v1328, 8
        %v1371 = vpop.permute.xlu0 %1370
        %1372 = vrot.lane.b32.xlu0 %v1329, 8
        %v1373 = vpop.permute.xlu0 %1372
        %1374 = vrot.lane.b32.xlu0 %v1330, 8
        %v1375 = vpop.permute.xlu0 %1374
        %1376 = vrot.lane.b32.xlu0 %v1331, 8
        %v1377 = vpop.permute.xlu0 %1376
        %1378 = vrot.lane.b32.xlu0 %v1332, 8
        %v1379 = vpop.permute.xlu0 %1378
        %1380 = vrot.lane.b32.xlu0 %v1333, 8
        %v1381 = vpop.permute.xlu0 %1380
        %vm1398 = vcmask 64512
        %v1399 = vsel %vm1398, %v922, %v1351
        %v1400 = vsel %vm1398, %v923, %v1353
        %v1401 = vsel %vm1398, %v924, %v1355
        %v1402 = vsel %vm1398, %v925, %v1357
        %v1403 = vsel %vm1398, %v926, %v1359
        %v1404 = vsel %vm1398, %v927, %v1361
        %v1405 = vsel %vm1398, %v928, %v1363
        %v1406 = vsel %vm1398, %v929, %v1365
        %v1407 = vsel %vm1398, %v930, %v1367
        %v1408 = vsel %vm1398, %v931, %v1369
        %v1409 = vsel %vm1398, %v932, %v1371
        %v1410 = vsel %vm1398, %v933, %v1373
        %v1411 = vsel %vm1398, %v934, %v1375
        %v1412 = vsel %vm1398, %v935, %v1377
        %v1413 = vsel %vm1398, %v936, %v1379
        %v1414 = vsel %vm1398, %v937, %v1381
        %vm1415 = vcmask 130048
        %1416 = vst.msk [vmem:[%s297] sm:$0xff] %vm1415, %v1399
        %1417 = vst.msk [vmem:[%s297 + $0x8] sm:$0xff] %vm1415, %v1400
        %1418 = vst.msk [vmem:[%s297 + $0x20] sm:$0xff] %vm1415, %v1401
        %1419 = vst.msk [vmem:[%s297 + $0x28] sm:$0xff] %vm1415, %v1402
        %1420 = vst.msk [vmem:[%s297 + $0x40] sm:$0xff] %vm1415, %v1403
        %1421 = vst.msk [vmem:[%s297 + $0x48] sm:$0xff] %vm1415, %v1404
        %1422 = vst.msk [vmem:[%s297 + $0x60] sm:$0xff] %vm1415, %v1405
        %1423 = vst.msk [vmem:[%s297 + $0x68] sm:$0xff] %vm1415, %v1406
        %1424 = vst.msk [vmem:[%s297 + $0x80] sm:$0xff] %vm1415, %v1407
        %1425 = vst.msk [vmem:[%s297 + $0x88] sm:$0xff] %vm1415, %v1408
        %1426 = vst.msk [vmem:[%s297 + $0xa0] sm:$0xff] %vm1415, %v1409
        %1427 = vst.msk [vmem:[%s297 + $0xa8] sm:$0xff] %vm1415, %v1410
        %1428 = vst.msk [vmem:[%s297 + $0xc0] sm:$0xff] %vm1415, %v1411
        %1429 = vst.msk [vmem:[%s297 + $0xc8] sm:$0xff] %vm1415, %v1412
        %1430 = vst.msk [vmem:[%s297 + $0xe0] sm:$0xff] %vm1415, %v1413
        %1431 = vst.msk [vmem:[%s297 + $0xe8] sm:$0xff] %vm1415, %v1414
        %s1432 = scalar_lea.vmem %s2, 32
        %v1433 = vld [vmem:[%s1432] sm:$0xf]
        %s1434 = scalar_lea.vmem %s2, 36
        %v1435 = vld [vmem:[%s1434] sm:$0xf]
        %v1437 = vsel %vm535, %v1435, 0
        %1439 = vmatpush.msra.mxu0 0.0
        %1440 = vmatpush.msra.mxu0 0.0
        %1441 = vmatpush.msra.mxu0 0.0
        %1442 = vmatpush.msra.mxu0 0.0
        %1443 = vmatpush.msra.mxu0 0.0
        %1444 = vmatpush.msra.mxu0 0.0
        %1445 = vmatpush.msra.mxu0 0.0
        %1446 = vmatpush.msra.mxu0 0.0
        %1447 = vmatpush.msra.mxu0 0.0
        %1448 = vmatpush.msra.mxu0 0.0
        %1449 = vmatpush.msra.mxu0 0.0
        %1450 = vmatpush.msra.mxu0 0.0
        %1451 = vmatpush.msra.mxu0 0.0
        %1452 = vmatpush.msra.mxu0 0.0
        %1453 = vmatpush.msra.mxu0 0.0
        %1454 = vmatpush.msra.mxu0 %v1437
        %1455 = vmatmul.f32.gmra.mxu0 %v507
        %v1456 = vpop.f32.mrf.mxu0
        %v1457 = vadd.f32 0.0, %v1456
        %1458 = vmatmul.f32.gmra.mxu0 %v509
        %v1459 = vpop.f32.mrf.mxu0
        %v1460 = vadd.f32 0.0, %v1459
        %1461 = vmatmul.f32.gmra.mxu0 %v511
        %v1462 = vpop.f32.mrf.mxu0
        %v1463 = vadd.f32 0.0, %v1462
        %1464 = vmatmul.f32.gmra.mxu0 %v513
        %v1465 = vpop.f32.mrf.mxu0
        %v1466 = vadd.f32 0.0, %v1465
        %1467 = vmatmul.f32.gmra.mxu0 %v515
        %v1468 = vpop.f32.mrf.mxu0
        %v1469 = vadd.f32 0.0, %v1468
        %1470 = vmatmul.f32.gmra.mxu0 %v517
        %v1471 = vpop.f32.mrf.mxu0
        %v1472 = vadd.f32 0.0, %v1471
        %1473 = vmatmul.f32.gmra.mxu0 %v519
        %v1474 = vpop.f32.mrf.mxu0
        %v1475 = vadd.f32 0.0, %v1474
        %1476 = vmatmul.f32.gmra.mxu0 %v521
        %v1477 = vpop.f32.mrf.mxu0
        %v1478 = vadd.f32 0.0, %v1477
        %1479 = vmatmul.f32.gmra.mxu0 %v523
        %v1480 = vpop.f32.mrf.mxu0
        %v1481 = vadd.f32 0.0, %v1480
        %1482 = vmatmul.f32.gmra.mxu0 %v525
        %v1483 = vpop.f32.mrf.mxu0
        %v1484 = vadd.f32 0.0, %v1483
        %1485 = vmatmul.f32.gmra.mxu0 %v527
        %v1486 = vpop.f32.mrf.mxu0
        %v1487 = vadd.f32 0.0, %v1486
        %1488 = vmatmul.f32.gmra.mxu0 %v529
        %v1489 = vpop.f32.mrf.mxu0
        %v1490 = vadd.f32 0.0, %v1489
        %1491 = vmatmul.f32.gmra.mxu0 %v531
        %v1492 = vpop.f32.mrf.mxu0
        %v1493 = vadd.f32 0.0, %v1492
        %1494 = vmatmul.f32.gmra.mxu0 %v533
        %v1495 = vpop.f32.mrf.mxu0
        %v1496 = vadd.f32 0.0, %v1495
        %1497 = vmatmul.f32.gmra.mxu0 %v796
        %v1498 = vpop.f32.mrf.mxu0
        %v1499 = vadd.f32 0.0, %v1498
        %1500 = vmatmul.f32.gmra.mxu0 %v798
        %v1501 = vpop.f32.mrf.mxu0
        %v1502 = vadd.f32 0.0, %v1501
        %1503 = vdwg.mxu0
        %v1505 = vsel %vm535, %v1433, 0
        %1507 = vmatpush.msra.mxu0 0.0
        %1508 = vmatpush.msra.mxu0 0.0
        %1509 = vmatpush.msra.mxu0 0.0
        %1510 = vmatpush.msra.mxu0 0.0
        %1511 = vmatpush.msra.mxu0 0.0
        %1512 = vmatpush.msra.mxu0 0.0
        %1513 = vmatpush.msra.mxu0 0.0
        %1514 = vmatpush.msra.mxu0 0.0
        %1515 = vmatpush.msra.mxu0 0.0
        %1516 = vmatpush.msra.mxu0 0.0
        %1517 = vmatpush.msra.mxu0 0.0
        %1518 = vmatpush.msra.mxu0 0.0
        %1519 = vmatpush.msra.mxu0 0.0
        %1520 = vmatpush.msra.mxu0 0.0
        %1521 = vmatpush.msra.mxu0 0.0
        %1522 = vmatpush.msra.mxu0 %v1505
        %1523 = vmatmul.f32.gmra.mxu0 %v608
        %v1524 = vpop.f32.mrf.mxu0
        %v1525 = vadd.f32 %v1457, %v1524
        %1526 = vmatmul.f32.gmra.mxu0 %v610
        %v1527 = vpop.f32.mrf.mxu0
        %v1528 = vadd.f32 %v1460, %v1527
        %1529 = vmatmul.f32.gmra.mxu0 %v612
        %v1530 = vpop.f32.mrf.mxu0
        %v1531 = vadd.f32 %v1463, %v1530
        %1532 = vmatmul.f32.gmra.mxu0 %v614
        %v1533 = vpop.f32.mrf.mxu0
        %v1534 = vadd.f32 %v1466, %v1533
        %1535 = vmatmul.f32.gmra.mxu0 %v616
        %v1536 = vpop.f32.mrf.mxu0
        %v1537 = vadd.f32 %v1469, %v1536
        %1538 = vmatmul.f32.gmra.mxu0 %v618
        %v1539 = vpop.f32.mrf.mxu0
        %v1540 = vadd.f32 %v1472, %v1539
        %1541 = vmatmul.f32.gmra.mxu0 %v620
        %v1542 = vpop.f32.mrf.mxu0
        %v1543 = vadd.f32 %v1475, %v1542
        %1544 = vmatmul.f32.gmra.mxu0 %v622
        %v1545 = vpop.f32.mrf.mxu0
        %v1546 = vadd.f32 %v1478, %v1545
        %1547 = vmatmul.f32.gmra.mxu0 %v624
        %v1548 = vpop.f32.mrf.mxu0
        %v1549 = vadd.f32 %v1481, %v1548
        %1550 = vmatmul.f32.gmra.mxu0 %v626
        %v1551 = vpop.f32.mrf.mxu0
        %v1552 = vadd.f32 %v1484, %v1551
        %1553 = vmatmul.f32.gmra.mxu0 %v628
        %v1554 = vpop.f32.mrf.mxu0
        %v1555 = vadd.f32 %v1487, %v1554
        %1556 = vmatmul.f32.gmra.mxu0 %v630
        %v1557 = vpop.f32.mrf.mxu0
        %v1558 = vadd.f32 %v1490, %v1557
        %1559 = vmatmul.f32.gmra.mxu0 %v632
        %v1560 = vpop.f32.mrf.mxu0
        %v1561 = vadd.f32 %v1493, %v1560
        %1562 = vmatmul.f32.gmra.mxu0 %v634
        %v1563 = vpop.f32.mrf.mxu0
        %v1564 = vadd.f32 %v1496, %v1563
        %1565 = vmatmul.f32.gmra.mxu0 %v706
        %v1566 = vpop.f32.mrf.mxu0
        %v1567 = vadd.f32 %v1499, %v1566
        %1568 = vmatmul.f32.gmra.mxu0 %v708
        %v1569 = vpop.f32.mrf.mxu0
        %v1570 = vadd.f32 %v1502, %v1569
        %1571 = vdwg.mxu0
        %s1572 = scalar_lea.vmem %s2, 40
        %v1573 = vld [vmem:[%s1572] sm:$0xf]
        %v1574 = vsel %vm502, %v362, 0
        %v1576 = vsel %vm502, %v363, 0
        %v1579 = vsel %vm535, %v1573, 0
        %1581 = vmatpush.msra.mxu0 0.0
        %1582 = vmatpush.msra.mxu0 0.0
        %1583 = vmatpush.msra.mxu0 0.0
        %1584 = vmatpush.msra.mxu0 0.0
        %1585 = vmatpush.msra.mxu0 0.0
        %1586 = vmatpush.msra.mxu0 0.0
        %1587 = vmatpush.msra.mxu0 0.0
        %1588 = vmatpush.msra.mxu0 0.0
        %1589 = vmatpush.msra.mxu0 0.0
        %1590 = vmatpush.msra.mxu0 0.0
        %1591 = vmatpush.msra.mxu0 0.0
        %1592 = vmatpush.msra.mxu0 0.0
        %1593 = vmatpush.msra.mxu0 0.0
        %1594 = vmatpush.msra.mxu0 0.0
        %1595 = vmatpush.msra.mxu0 0.0
        %1596 = vmatpush.msra.mxu0 %v1579
        %1597 = vmatmul.f32.gmra.mxu0 %v612
        %v1598 = vpop.f32.mrf.mxu0
        %v1599 = vadd.f32 0.0, %v1598
        %1600 = vmatmul.f32.gmra.mxu0 %v614
        %v1601 = vpop.f32.mrf.mxu0
        %v1602 = vadd.f32 0.0, %v1601
        %1603 = vmatmul.f32.gmra.mxu0 %v616
        %v1604 = vpop.f32.mrf.mxu0
        %v1605 = vadd.f32 0.0, %v1604
        %1606 = vmatmul.f32.gmra.mxu0 %v618
        %v1607 = vpop.f32.mrf.mxu0
        %v1608 = vadd.f32 0.0, %v1607
        %1609 = vmatmul.f32.gmra.mxu0 %v620
        %v1610 = vpop.f32.mrf.mxu0
        %v1611 = vadd.f32 0.0, %v1610
        %1612 = vmatmul.f32.gmra.mxu0 %v622
        %v1613 = vpop.f32.mrf.mxu0
        %v1614 = vadd.f32 0.0, %v1613
        %1615 = vmatmul.f32.gmra.mxu0 %v624
        %v1616 = vpop.f32.mrf.mxu0
        %v1617 = vadd.f32 0.0, %v1616
        %1618 = vmatmul.f32.gmra.mxu0 %v626
        %v1619 = vpop.f32.mrf.mxu0
        %v1620 = vadd.f32 0.0, %v1619
        %1621 = vmatmul.f32.gmra.mxu0 %v628
        %v1622 = vpop.f32.mrf.mxu0
        %v1623 = vadd.f32 0.0, %v1622
        %1624 = vmatmul.f32.gmra.mxu0 %v630
        %v1625 = vpop.f32.mrf.mxu0
        %v1626 = vadd.f32 0.0, %v1625
        %1627 = vmatmul.f32.gmra.mxu0 %v632
        %v1628 = vpop.f32.mrf.mxu0
        %v1629 = vadd.f32 0.0, %v1628
        %1630 = vmatmul.f32.gmra.mxu0 %v634
        %v1631 = vpop.f32.mrf.mxu0
        %v1632 = vadd.f32 0.0, %v1631
        %1633 = vmatmul.f32.gmra.mxu0 %v706
        %v1634 = vpop.f32.mrf.mxu0
        %v1635 = vadd.f32 0.0, %v1634
        %1636 = vmatmul.f32.gmra.mxu0 %v708
        %v1637 = vpop.f32.mrf.mxu0
        %v1638 = vadd.f32 0.0, %v1637
        %1639 = vmatmul.f32.gmra.mxu0 %v1574
        %v1640 = vpop.f32.mrf.mxu0
        %v1641 = vadd.f32 0.0, %v1640
        %1642 = vmatmul.f32.gmra.mxu0 %v1576
        %v1643 = vpop.f32.mrf.mxu0
        %v1644 = vadd.f32 0.0, %v1643
        %1645 = vdwg.mxu0
        %v1646 = vadd.f32 %v1525, %v1599
        %v1647 = vadd.f32 %v1528, %v1602
        %v1648 = vadd.f32 %v1531, %v1605
        %v1649 = vadd.f32 %v1534, %v1608
        %v1650 = vadd.f32 %v1537, %v1611
        %v1651 = vadd.f32 %v1540, %v1614
        %v1652 = vadd.f32 %v1543, %v1617
        %v1653 = vadd.f32 %v1546, %v1620
        %v1654 = vadd.f32 %v1549, %v1623
        %v1655 = vadd.f32 %v1552, %v1626
        %v1656 = vadd.f32 %v1555, %v1629
        %v1657 = vadd.f32 %v1558, %v1632
        %v1658 = vadd.f32 %v1561, %v1635
        %v1659 = vadd.f32 %v1564, %v1638
        %v1660 = vadd.f32 %v1567, %v1641
        %v1661 = vadd.f32 %v1570, %v1644
        %s1662 = scalar_lea.vmem %s2, 44
        %v1663 = vld [vmem:[%s1662] sm:$0xf]
        %v1664 = vsel %vm502, %v443, 0
        %v1666 = vsel %vm502, %v445, 0
        %v1669 = vsel %vm535, %v1663, 0
        %1671 = vmatpush.msra.mxu0 0.0
        %1672 = vmatpush.msra.mxu0 0.0
        %1673 = vmatpush.msra.mxu0 0.0
        %1674 = vmatpush.msra.mxu0 0.0
        %1675 = vmatpush.msra.mxu0 0.0
        %1676 = vmatpush.msra.mxu0 0.0
        %1677 = vmatpush.msra.mxu0 0.0
        %1678 = vmatpush.msra.mxu0 0.0
        %1679 = vmatpush.msra.mxu0 0.0
        %1680 = vmatpush.msra.mxu0 0.0
        %1681 = vmatpush.msra.mxu0 0.0
        %1682 = vmatpush.msra.mxu0 0.0
        %1683 = vmatpush.msra.mxu0 0.0
        %1684 = vmatpush.msra.mxu0 0.0
        %1685 = vmatpush.msra.mxu0 0.0
        %1686 = vmatpush.msra.mxu0 %v1669
        %1687 = vmatmul.f32.gmra.mxu0 %v511
        %v1688 = vpop.f32.mrf.mxu0
        %v1689 = vadd.f32 0.0, %v1688
        %1690 = vmatmul.f32.gmra.mxu0 %v513
        %v1691 = vpop.f32.mrf.mxu0
        %v1692 = vadd.f32 0.0, %v1691
        %1693 = vmatmul.f32.gmra.mxu0 %v515
        %v1694 = vpop.f32.mrf.mxu0
        %v1695 = vadd.f32 0.0, %v1694
        %1696 = vmatmul.f32.gmra.mxu0 %v517
        %v1697 = vpop.f32.mrf.mxu0
        %v1698 = vadd.f32 0.0, %v1697
        %1699 = vmatmul.f32.gmra.mxu0 %v519
        %v1700 = vpop.f32.mrf.mxu0
        %v1701 = vadd.f32 0.0, %v1700
        %1702 = vmatmul.f32.gmra.mxu0 %v521
        %v1703 = vpop.f32.mrf.mxu0
        %v1704 = vadd.f32 0.0, %v1703
        %1705 = vmatmul.f32.gmra.mxu0 %v523
        %v1706 = vpop.f32.mrf.mxu0
        %v1707 = vadd.f32 0.0, %v1706
        %1708 = vmatmul.f32.gmra.mxu0 %v525
        %v1709 = vpop.f32.mrf.mxu0
        %v1710 = vadd.f32 0.0, %v1709
        %1711 = vmatmul.f32.gmra.mxu0 %v527
        %v1712 = vpop.f32.mrf.mxu0
        %v1713 = vadd.f32 0.0, %v1712
        %1714 = vmatmul.f32.gmra.mxu0 %v529
        %v1715 = vpop.f32.mrf.mxu0
        %v1716 = vadd.f32 0.0, %v1715
        %1717 = vmatmul.f32.gmra.mxu0 %v531
        %v1718 = vpop.f32.mrf.mxu0
        %v1719 = vadd.f32 0.0, %v1718
        %1720 = vmatmul.f32.gmra.mxu0 %v533
        %v1721 = vpop.f32.mrf.mxu0
        %v1722 = vadd.f32 0.0, %v1721
        %1723 = vmatmul.f32.gmra.mxu0 %v796
        %v1724 = vpop.f32.mrf.mxu0
        %v1725 = vadd.f32 0.0, %v1724
        %1726 = vmatmul.f32.gmra.mxu0 %v798
        %v1727 = vpop.f32.mrf.mxu0
        %v1728 = vadd.f32 0.0, %v1727
        %1729 = vmatmul.f32.gmra.mxu0 %v1664
        %v1730 = vpop.f32.mrf.mxu0
        %v1731 = vadd.f32 0.0, %v1730
        %1732 = vmatmul.f32.gmra.mxu0 %v1666
        %v1733 = vpop.f32.mrf.mxu0
        %v1734 = vadd.f32 0.0, %v1733
        %1735 = vdwg.mxu0
        %v1736 = vadd.f32 %v1646, %v1689
        %v1737 = vadd.f32 %v1647, %v1692
        %v1738 = vadd.f32 %v1648, %v1695
        %v1739 = vadd.f32 %v1649, %v1698
        %v1740 = vadd.f32 %v1650, %v1701
        %v1741 = vadd.f32 %v1651, %v1704
        %v1742 = vadd.f32 %v1652, %v1707
        %v1743 = vadd.f32 %v1653, %v1710
        %v1744 = vadd.f32 %v1654, %v1713
        %v1745 = vadd.f32 %v1655, %v1716
        %v1746 = vadd.f32 %v1656, %v1719
        %v1747 = vadd.f32 %v1657, %v1722
        %v1748 = vadd.f32 %v1658, %v1725
        %v1749 = vadd.f32 %v1659, %v1728
        %v1750 = vadd.f32 %v1660, %v1731
        %v1751 = vadd.f32 %v1661, %v1734
        %v1752 = vmul.f32 %v1736, %v885
        %v1753 = vmul.f32 %v1737, %v885
        %v1754 = vmul.f32 %v1738, %v885
        %v1755 = vmul.f32 %v1739, %v885
        %v1756 = vmul.f32 %v1740, %v885
        %v1757 = vmul.f32 %v1741, %v885
        %v1758 = vmul.f32 %v1742, %v885
        %v1759 = vmul.f32 %v1743, %v885
        %v1760 = vmul.f32 %v1744, %v885
        %v1761 = vmul.f32 %v1745, %v885
        %v1762 = vmul.f32 %v1746, %v885
        %v1763 = vmul.f32 %v1747, %v885
        %v1764 = vmul.f32 %v1748, %v885
        %v1765 = vmul.f32 %v1749, %v885
        %v1766 = vmul.f32 %v1750, %v885
        %v1767 = vmul.f32 %v1751, %v885
        %v1768 = vadd.f32 %v1752, %v904
        %v1769 = vadd.f32 %v1753, %v904
        %v1770 = vadd.f32 %v1754, %v904
        %v1771 = vadd.f32 %v1755, %v904
        %v1772 = vadd.f32 %v1756, %v904
        %v1773 = vadd.f32 %v1757, %v904
        %v1774 = vadd.f32 %v1758, %v904
        %v1775 = vadd.f32 %v1759, %v904
        %v1776 = vadd.f32 %v1760, %v904
        %v1777 = vadd.f32 %v1761, %v904
        %v1778 = vadd.f32 %v1762, %v904
        %v1779 = vadd.f32 %v1763, %v904
        %v1780 = vadd.f32 %v1764, %v904
        %v1781 = vadd.f32 %v1765, %v904
        %v1782 = vadd.f32 %v1766, %v904
        %v1783 = vadd.f32 %v1767, %v904
        %v1784 = vmax.f32 %v1768, 0.0
        %v1785 = vmax.f32 %v1769, 0.0
        %v1786 = vmax.f32 %v1770, 0.0
        %v1787 = vmax.f32 %v1771, 0.0
        %v1788 = vmax.f32 %v1772, 0.0
        %v1789 = vmax.f32 %v1773, 0.0
        %v1790 = vmax.f32 %v1774, 0.0
        %v1791 = vmax.f32 %v1775, 0.0
        %v1792 = vmax.f32 %v1776, 0.0
        %v1793 = vmax.f32 %v1777, 0.0
        %v1794 = vmax.f32 %v1778, 0.0
        %v1795 = vmax.f32 %v1779, 0.0
        %v1796 = vmax.f32 %v1780, 0.0
        %v1797 = vmax.f32 %v1781, 0.0
        %v1798 = vmax.f32 %v1782, 0.0
        %v1799 = vmax.f32 %v1783, 0.0
        %s1800 = scalar_lea.vmem %s2, 48
        %v1801 = vld [vmem:[%s1800] sm:$0xf]
        %s1802 = scalar_lea.vmem %s2, 52
        %v1803 = vld [vmem:[%s1802] sm:$0xf]
        %v1805 = vsel %vm535, %v1803, 0
        %1807 = vmatpush.msra.mxu0 0.0
        %1808 = vmatpush.msra.mxu0 0.0
        %1809 = vmatpush.msra.mxu0 0.0
        %1810 = vmatpush.msra.mxu0 0.0
        %1811 = vmatpush.msra.mxu0 0.0
        %1812 = vmatpush.msra.mxu0 0.0
        %1813 = vmatpush.msra.mxu0 0.0
        %1814 = vmatpush.msra.mxu0 0.0
        %1815 = vmatpush.msra.mxu0 0.0
        %1816 = vmatpush.msra.mxu0 0.0
        %1817 = vmatpush.msra.mxu0 0.0
        %1818 = vmatpush.msra.mxu0 0.0
        %1819 = vmatpush.msra.mxu0 0.0
        %1820 = vmatpush.msra.mxu0 0.0
        %1821 = vmatpush.msra.mxu0 0.0
        %1822 = vmatpush.msra.mxu0 %v1805
        %1823 = vmatmul.f32.gmra.mxu0 %v946
        %v1824 = vpop.f32.mrf.mxu0
        %v1825 = vadd.f32 0.0, %v1824
        %1826 = vmatmul.f32.gmra.mxu0 %v948
        %v1827 = vpop.f32.mrf.mxu0
        %v1828 = vadd.f32 0.0, %v1827
        %1829 = vmatmul.f32.gmra.mxu0 %v950
        %v1830 = vpop.f32.mrf.mxu0
        %v1831 = vadd.f32 0.0, %v1830
        %1832 = vmatmul.f32.gmra.mxu0 %v952
        %v1833 = vpop.f32.mrf.mxu0
        %v1834 = vadd.f32 0.0, %v1833
        %1835 = vmatmul.f32.gmra.mxu0 %v954
        %v1836 = vpop.f32.mrf.mxu0
        %v1837 = vadd.f32 0.0, %v1836
        %1838 = vmatmul.f32.gmra.mxu0 %v956
        %v1839 = vpop.f32.mrf.mxu0
        %v1840 = vadd.f32 0.0, %v1839
        %1841 = vmatmul.f32.gmra.mxu0 %v958
        %v1842 = vpop.f32.mrf.mxu0
        %v1843 = vadd.f32 0.0, %v1842
        %1844 = vmatmul.f32.gmra.mxu0 %v960
        %v1845 = vpop.f32.mrf.mxu0
        %v1846 = vadd.f32 0.0, %v1845
        %1847 = vmatmul.f32.gmra.mxu0 %v962
        %v1848 = vpop.f32.mrf.mxu0
        %v1849 = vadd.f32 0.0, %v1848
        %1850 = vmatmul.f32.gmra.mxu0 %v964
        %v1851 = vpop.f32.mrf.mxu0
        %v1852 = vadd.f32 0.0, %v1851
        %1853 = vmatmul.f32.gmra.mxu0 %v966
        %v1854 = vpop.f32.mrf.mxu0
        %v1855 = vadd.f32 0.0, %v1854
        %1856 = vmatmul.f32.gmra.mxu0 %v968
        %v1857 = vpop.f32.mrf.mxu0
        %v1858 = vadd.f32 0.0, %v1857
        %1859 = vmatmul.f32.gmra.mxu0 %v970
        %v1860 = vpop.f32.mrf.mxu0
        %v1861 = vadd.f32 0.0, %v1860
        %1862 = vmatmul.f32.gmra.mxu0 %v972
        %v1863 = vpop.f32.mrf.mxu0
        %v1864 = vadd.f32 0.0, %v1863
        %1865 = vmatmul.f32.gmra.mxu0 %v1198
        %v1866 = vpop.f32.mrf.mxu0
        %v1867 = vadd.f32 0.0, %v1866
        %1868 = vmatmul.f32.gmra.mxu0 %v1200
        %v1869 = vpop.f32.mrf.mxu0
        %v1870 = vadd.f32 0.0, %v1869
        %1871 = vdwg.mxu0
        %v1873 = vsel %vm535, %v1801, 0
        %1875 = vmatpush.msra.mxu0 0.0
        %1876 = vmatpush.msra.mxu0 0.0
        %1877 = vmatpush.msra.mxu0 0.0
        %1878 = vmatpush.msra.mxu0 0.0
        %1879 = vmatpush.msra.mxu0 0.0
        %1880 = vmatpush.msra.mxu0 0.0
        %1881 = vmatpush.msra.mxu0 0.0
        %1882 = vmatpush.msra.mxu0 0.0
        %1883 = vmatpush.msra.mxu0 0.0
        %1884 = vmatpush.msra.mxu0 0.0
        %1885 = vmatpush.msra.mxu0 0.0
        %1886 = vmatpush.msra.mxu0 0.0
        %1887 = vmatpush.msra.mxu0 0.0
        %1888 = vmatpush.msra.mxu0 0.0
        %1889 = vmatpush.msra.mxu0 0.0
        %1890 = vmatpush.msra.mxu0 %v1873
        %1891 = vmatmul.f32.gmra.mxu0 %v507
        %v1892 = vpop.f32.mrf.mxu0
        %v1893 = vadd.f32 %v1825, %v1892
        %1894 = vmatmul.f32.gmra.mxu0 %v509
        %v1895 = vpop.f32.mrf.mxu0
        %v1896 = vadd.f32 %v1828, %v1895
        %1897 = vmatmul.f32.gmra.mxu0 %v511
        %v1898 = vpop.f32.mrf.mxu0
        %v1899 = vadd.f32 %v1831, %v1898
        %1900 = vmatmul.f32.gmra.mxu0 %v513
        %v1901 = vpop.f32.mrf.mxu0
        %v1902 = vadd.f32 %v1834, %v1901
        %1903 = vmatmul.f32.gmra.mxu0 %v515
        %v1904 = vpop.f32.mrf.mxu0
        %v1905 = vadd.f32 %v1837, %v1904
        %1906 = vmatmul.f32.gmra.mxu0 %v517
        %v1907 = vpop.f32.mrf.mxu0
        %v1908 = vadd.f32 %v1840, %v1907
        %1909 = vmatmul.f32.gmra.mxu0 %v519
        %v1910 = vpop.f32.mrf.mxu0
        %v1911 = vadd.f32 %v1843, %v1910
        %1912 = vmatmul.f32.gmra.mxu0 %v521
        %v1913 = vpop.f32.mrf.mxu0
        %v1914 = vadd.f32 %v1846, %v1913
        %1915 = vmatmul.f32.gmra.mxu0 %v523
        %v1916 = vpop.f32.mrf.mxu0
        %v1917 = vadd.f32 %v1849, %v1916
        %1918 = vmatmul.f32.gmra.mxu0 %v525
        %v1919 = vpop.f32.mrf.mxu0
        %v1920 = vadd.f32 %v1852, %v1919
        %1921 = vmatmul.f32.gmra.mxu0 %v527
        %v1922 = vpop.f32.mrf.mxu0
        %v1923 = vadd.f32 %v1855, %v1922
        %1924 = vmatmul.f32.gmra.mxu0 %v529
        %v1925 = vpop.f32.mrf.mxu0
        %v1926 = vadd.f32 %v1858, %v1925
        %1927 = vmatmul.f32.gmra.mxu0 %v531
        %v1928 = vpop.f32.mrf.mxu0
        %v1929 = vadd.f32 %v1861, %v1928
        %1930 = vmatmul.f32.gmra.mxu0 %v533
        %v1931 = vpop.f32.mrf.mxu0
        %v1932 = vadd.f32 %v1864, %v1931
        %1933 = vmatmul.f32.gmra.mxu0 %v796
        %v1934 = vpop.f32.mrf.mxu0
        %v1935 = vadd.f32 %v1867, %v1934
        %1936 = vmatmul.f32.gmra.mxu0 %v798
        %v1937 = vpop.f32.mrf.mxu0
        %v1938 = vadd.f32 %v1870, %v1937
        %1939 = vdwg.mxu0
        %s1940 = scalar_lea.vmem %s2, 56
        %v1941 = vld [vmem:[%s1940] sm:$0xf]
        %v1943 = vsel %vm535, %v1941, 0
        %1945 = vmatpush.msra.mxu0 0.0
        %1946 = vmatpush.msra.mxu0 0.0
        %1947 = vmatpush.msra.mxu0 0.0
        %1948 = vmatpush.msra.mxu0 0.0
        %1949 = vmatpush.msra.mxu0 0.0
        %1950 = vmatpush.msra.mxu0 0.0
        %1951 = vmatpush.msra.mxu0 0.0
        %1952 = vmatpush.msra.mxu0 0.0
        %1953 = vmatpush.msra.mxu0 0.0
        %1954 = vmatpush.msra.mxu0 0.0
        %1955 = vmatpush.msra.mxu0 0.0
        %1956 = vmatpush.msra.mxu0 0.0
        %1957 = vmatpush.msra.mxu0 0.0
        %1958 = vmatpush.msra.mxu0 0.0
        %1959 = vmatpush.msra.mxu0 0.0
        %1960 = vmatpush.msra.mxu0 %v1943
        %1961 = vmatmul.f32.gmra.mxu0 %v511
        %v1962 = vpop.f32.mrf.mxu0
        %v1963 = vadd.f32 0.0, %v1962
        %1964 = vmatmul.f32.gmra.mxu0 %v513
        %v1965 = vpop.f32.mrf.mxu0
        %v1966 = vadd.f32 0.0, %v1965
        %1967 = vmatmul.f32.gmra.mxu0 %v515
        %v1968 = vpop.f32.mrf.mxu0
        %v1969 = vadd.f32 0.0, %v1968
        %1970 = vmatmul.f32.gmra.mxu0 %v517
        %v1971 = vpop.f32.mrf.mxu0
        %v1972 = vadd.f32 0.0, %v1971
        %1973 = vmatmul.f32.gmra.mxu0 %v519
        %v1974 = vpop.f32.mrf.mxu0
        %v1975 = vadd.f32 0.0, %v1974
        %1976 = vmatmul.f32.gmra.mxu0 %v521
        %v1977 = vpop.f32.mrf.mxu0
        %v1978 = vadd.f32 0.0, %v1977
        %1979 = vmatmul.f32.gmra.mxu0 %v523
        %v1980 = vpop.f32.mrf.mxu0
        %v1981 = vadd.f32 0.0, %v1980
        %1982 = vmatmul.f32.gmra.mxu0 %v525
        %v1983 = vpop.f32.mrf.mxu0
        %v1984 = vadd.f32 0.0, %v1983
        %1985 = vmatmul.f32.gmra.mxu0 %v527
        %v1986 = vpop.f32.mrf.mxu0
        %v1987 = vadd.f32 0.0, %v1986
        %1988 = vmatmul.f32.gmra.mxu0 %v529
        %v1989 = vpop.f32.mrf.mxu0
        %v1990 = vadd.f32 0.0, %v1989
        %1991 = vmatmul.f32.gmra.mxu0 %v531
        %v1992 = vpop.f32.mrf.mxu0
        %v1993 = vadd.f32 0.0, %v1992
        %1994 = vmatmul.f32.gmra.mxu0 %v533
        %v1995 = vpop.f32.mrf.mxu0
        %v1996 = vadd.f32 0.0, %v1995
        %1997 = vmatmul.f32.gmra.mxu0 %v796
        %v1998 = vpop.f32.mrf.mxu0
        %v1999 = vadd.f32 0.0, %v1998
        %2000 = vmatmul.f32.gmra.mxu0 %v798
        %v2001 = vpop.f32.mrf.mxu0
        %v2002 = vadd.f32 0.0, %v2001
        %2003 = vmatmul.f32.gmra.mxu0 %v1664
        %v2004 = vpop.f32.mrf.mxu0
        %v2005 = vadd.f32 0.0, %v2004
        %2006 = vmatmul.f32.gmra.mxu0 %v1666
        %v2007 = vpop.f32.mrf.mxu0
        %v2008 = vadd.f32 0.0, %v2007
        %2009 = vdwg.mxu0
        %v2010 = vadd.f32 %v1893, %v1963
        %v2011 = vadd.f32 %v1896, %v1966
        %v2012 = vadd.f32 %v1899, %v1969
        %v2013 = vadd.f32 %v1902, %v1972
        %v2014 = vadd.f32 %v1905, %v1975
        %v2015 = vadd.f32 %v1908, %v1978
        %v2016 = vadd.f32 %v1911, %v1981
        %v2017 = vadd.f32 %v1914, %v1984
        %v2018 = vadd.f32 %v1917, %v1987
        %v2019 = vadd.f32 %v1920, %v1990
        %v2020 = vadd.f32 %v1923, %v1993
        %v2021 = vadd.f32 %v1926, %v1996
        %v2022 = vadd.f32 %v1929, %v1999
        %v2023 = vadd.f32 %v1932, %v2002
        %v2024 = vadd.f32 %v1935, %v2005
        %v2025 = vadd.f32 %v1938, %v2008
        %s2026 = scalar_lea.vmem %s2, 60
        %v2027 = vld [vmem:[%s2026] sm:$0xf]
        %v2028 = vsel %vm502, %v494, 0
        %v2030 = vsel %vm502, %v496, 0
        %v2033 = vsel %vm535, %v2027, 0
        %2035 = vmatpush.msra.mxu0 0.0
        %2036 = vmatpush.msra.mxu0 0.0
        %2037 = vmatpush.msra.mxu0 0.0
        %2038 = vmatpush.msra.mxu0 0.0
        %2039 = vmatpush.msra.mxu0 0.0
        %2040 = vmatpush.msra.mxu0 0.0
        %2041 = vmatpush.msra.mxu0 0.0
        %2042 = vmatpush.msra.mxu0 0.0
        %2043 = vmatpush.msra.mxu0 0.0
        %2044 = vmatpush.msra.mxu0 0.0
        %2045 = vmatpush.msra.mxu0 0.0
        %2046 = vmatpush.msra.mxu0 0.0
        %2047 = vmatpush.msra.mxu0 0.0
        %2048 = vmatpush.msra.mxu0 0.0
        %2049 = vmatpush.msra.mxu0 0.0
        %2050 = vmatpush.msra.mxu0 %v2033
        %2051 = vmatmul.f32.gmra.mxu0 %v950
        %v2052 = vpop.f32.mrf.mxu0
        %v2053 = vadd.f32 0.0, %v2052
        %2054 = vmatmul.f32.gmra.mxu0 %v952
        %v2055 = vpop.f32.mrf.mxu0
        %v2056 = vadd.f32 0.0, %v2055
        %2057 = vmatmul.f32.gmra.mxu0 %v954
        %v2058 = vpop.f32.mrf.mxu0
        %v2059 = vadd.f32 0.0, %v2058
        %2060 = vmatmul.f32.gmra.mxu0 %v956
        %v2061 = vpop.f32.mrf.mxu0
        %v2062 = vadd.f32 0.0, %v2061
        %2063 = vmatmul.f32.gmra.mxu0 %v958
        %v2064 = vpop.f32.mrf.mxu0
        %v2065 = vadd.f32 0.0, %v2064
        %2066 = vmatmul.f32.gmra.mxu0 %v960
        %v2067 = vpop.f32.mrf.mxu0
        %v2068 = vadd.f32 0.0, %v2067
        %2069 = vmatmul.f32.gmra.mxu0 %v962
        %v2070 = vpop.f32.mrf.mxu0
        %v2071 = vadd.f32 0.0, %v2070
        %2072 = vmatmul.f32.gmra.mxu0 %v964
        %v2073 = vpop.f32.mrf.mxu0
        %v2074 = vadd.f32 0.0, %v2073
        %2075 = vmatmul.f32.gmra.mxu0 %v966
        %v2076 = vpop.f32.mrf.mxu0
        %v2077 = vadd.f32 0.0, %v2076
        %2078 = vmatmul.f32.gmra.mxu0 %v968
        %v2079 = vpop.f32.mrf.mxu0
        %v2080 = vadd.f32 0.0, %v2079
        %2081 = vmatmul.f32.gmra.mxu0 %v970
        %v2082 = vpop.f32.mrf.mxu0
        %v2083 = vadd.f32 0.0, %v2082
        %2084 = vmatmul.f32.gmra.mxu0 %v972
        %v2085 = vpop.f32.mrf.mxu0
        %v2086 = vadd.f32 0.0, %v2085
        %2087 = vmatmul.f32.gmra.mxu0 %v1198
        %v2088 = vpop.f32.mrf.mxu0
        %v2089 = vadd.f32 0.0, %v2088
        %2090 = vmatmul.f32.gmra.mxu0 %v1200
        %v2091 = vpop.f32.mrf.mxu0
        %v2092 = vadd.f32 0.0, %v2091
        %2093 = vmatmul.f32.gmra.mxu0 %v2028
        %v2094 = vpop.f32.mrf.mxu0
        %v2095 = vadd.f32 0.0, %v2094
        %2096 = vmatmul.f32.gmra.mxu0 %v2030
        %v2097 = vpop.f32.mrf.mxu0
        %v2098 = vadd.f32 0.0, %v2097
        %2099 = vdwg.mxu0
        %v2100 = vadd.f32 %v2010, %v2053
        %v2101 = vadd.f32 %v2011, %v2056
        %v2102 = vadd.f32 %v2012, %v2059
        %v2103 = vadd.f32 %v2013, %v2062
        %v2104 = vadd.f32 %v2014, %v2065
        %v2105 = vadd.f32 %v2015, %v2068
        %v2106 = vadd.f32 %v2016, %v2071
        %v2107 = vadd.f32 %v2017, %v2074
        %v2108 = vadd.f32 %v2018, %v2077
        %v2109 = vadd.f32 %v2019, %v2080
        %v2110 = vadd.f32 %v2020, %v2083
        %v2111 = vadd.f32 %v2021, %v2086
        %v2112 = vadd.f32 %v2022, %v2089
        %v2113 = vadd.f32 %v2023, %v2092
        %v2114 = vadd.f32 %v2024, %v2095
        %v2115 = vadd.f32 %v2025, %v2098
        %v2116 = vmul.f32 %v2100, %v885
        %v2117 = vmul.f32 %v2101, %v885
        %v2118 = vmul.f32 %v2102, %v885
        %v2119 = vmul.f32 %v2103, %v885
        %v2120 = vmul.f32 %v2104, %v885
        %v2121 = vmul.f32 %v2105, %v885
        %v2122 = vmul.f32 %v2106, %v885
        %v2123 = vmul.f32 %v2107, %v885
        %v2124 = vmul.f32 %v2108, %v885
        %v2125 = vmul.f32 %v2109, %v885
        %v2126 = vmul.f32 %v2110, %v885
        %v2127 = vmul.f32 %v2111, %v885
        %v2128 = vmul.f32 %v2112, %v885
        %v2129 = vmul.f32 %v2113, %v885
        %v2130 = vmul.f32 %v2114, %v885
        %v2131 = vmul.f32 %v2115, %v885
        %v2132 = vadd.f32 %v2116, %v904
        %v2133 = vadd.f32 %v2117, %v904
        %v2134 = vadd.f32 %v2118, %v904
        %v2135 = vadd.f32 %v2119, %v904
        %v2136 = vadd.f32 %v2120, %v904
        %v2137 = vadd.f32 %v2121, %v904
        %v2138 = vadd.f32 %v2122, %v904
        %v2139 = vadd.f32 %v2123, %v904
        %v2140 = vadd.f32 %v2124, %v904
        %v2141 = vadd.f32 %v2125, %v904
        %v2142 = vadd.f32 %v2126, %v904
        %v2143 = vadd.f32 %v2127, %v904
        %v2144 = vadd.f32 %v2128, %v904
        %v2145 = vadd.f32 %v2129, %v904
        %v2146 = vadd.f32 %v2130, %v904
        %v2147 = vadd.f32 %v2131, %v904
        %v2148 = vmax.f32 %v2132, 0.0
        %v2149 = vmax.f32 %v2133, 0.0
        %v2150 = vmax.f32 %v2134, 0.0
        %v2151 = vmax.f32 %v2135, 0.0
        %v2152 = vmax.f32 %v2136, 0.0
        %v2153 = vmax.f32 %v2137, 0.0
        %v2154 = vmax.f32 %v2138, 0.0
        %v2155 = vmax.f32 %v2139, 0.0
        %v2156 = vmax.f32 %v2140, 0.0
        %v2157 = vmax.f32 %v2141, 0.0
        %v2158 = vmax.f32 %v2142, 0.0
        %v2159 = vmax.f32 %v2143, 0.0
        %v2160 = vmax.f32 %v2144, 0.0
        %v2161 = vmax.f32 %v2145, 0.0
        %v2162 = vmax.f32 %v2146, 0.0
        %v2163 = vmax.f32 %v2147, 0.0
        %2180 = vrot.lane.b32.xlu0 %v2148, 8
        %v2181 = vpop.permute.xlu0 %2180
        %2182 = vrot.lane.b32.xlu0 %v2149, 8
        %v2183 = vpop.permute.xlu0 %2182
        %2184 = vrot.lane.b32.xlu0 %v2150, 8
        %v2185 = vpop.permute.xlu0 %2184
        %2186 = vrot.lane.b32.xlu0 %v2151, 8
        %v2187 = vpop.permute.xlu0 %2186
        %2188 = vrot.lane.b32.xlu0 %v2152, 8
        %v2189 = vpop.permute.xlu0 %2188
        %2190 = vrot.lane.b32.xlu0 %v2153, 8
        %v2191 = vpop.permute.xlu0 %2190
        %2192 = vrot.lane.b32.xlu0 %v2154, 8
        %v2193 = vpop.permute.xlu0 %2192
        %2194 = vrot.lane.b32.xlu0 %v2155, 8
        %v2195 = vpop.permute.xlu0 %2194
        %2196 = vrot.lane.b32.xlu0 %v2156, 8
        %v2197 = vpop.permute.xlu0 %2196
        %2198 = vrot.lane.b32.xlu0 %v2157, 8
        %v2199 = vpop.permute.xlu0 %2198
        %2200 = vrot.lane.b32.xlu0 %v2158, 8
        %v2201 = vpop.permute.xlu0 %2200
        %2202 = vrot.lane.b32.xlu0 %v2159, 8
        %v2203 = vpop.permute.xlu0 %2202
        %2204 = vrot.lane.b32.xlu0 %v2160, 8
        %v2205 = vpop.permute.xlu0 %2204
        %2206 = vrot.lane.b32.xlu0 %v2161, 8
        %v2207 = vpop.permute.xlu0 %2206
        %2208 = vrot.lane.b32.xlu0 %v2162, 8
        %v2209 = vpop.permute.xlu0 %2208
        %2210 = vrot.lane.b32.xlu0 %v2163, 8
        %v2211 = vpop.permute.xlu0 %2210
        %v2228 = vsel %vm1398, %v1784, %v2181
        %v2229 = vsel %vm1398, %v1785, %v2183
        %v2230 = vsel %vm1398, %v1786, %v2185
        %v2231 = vsel %vm1398, %v1787, %v2187
        %v2232 = vsel %vm1398, %v1788, %v2189
        %v2233 = vsel %vm1398, %v1789, %v2191
        %v2234 = vsel %vm1398, %v1790, %v2193
        %v2235 = vsel %vm1398, %v1791, %v2195
        %v2236 = vsel %vm1398, %v1792, %v2197
        %v2237 = vsel %vm1398, %v1793, %v2199
        %v2238 = vsel %vm1398, %v1794, %v2201
        %v2239 = vsel %vm1398, %v1795, %v2203
        %v2240 = vsel %vm1398, %v1796, %v2205
        %v2241 = vsel %vm1398, %v1797, %v2207
        %v2242 = vsel %vm1398, %v1798, %v2209
        %v2243 = vsel %vm1398, %v1799, %v2211
        %s2244 = scalar_lea.vmem %s297, 16 [#allocation2]
        %2245 = vst.msk [vmem:[%s2244] sm:$0xff] %vm1415, %v2228
        %2246 = vst.msk [vmem:[%s2244 + $0x8] sm:$0xff] %vm1415, %v2229
        %2247 = vst.msk [vmem:[%s2244 + $0x20] sm:$0xff] %vm1415, %v2230
        %2248 = vst.msk [vmem:[%s2244 + $0x28] sm:$0xff] %vm1415, %v2231
        %2249 = vst.msk [vmem:[%s2244 + $0x40] sm:$0xff] %vm1415, %v2232
        %2250 = vst.msk [vmem:[%s2244 + $0x48] sm:$0xff] %vm1415, %v2233
        %2251 = vst.msk [vmem:[%s2244 + $0x60] sm:$0xff] %vm1415, %v2234
        %2252 = vst.msk [vmem:[%s2244 + $0x68] sm:$0xff] %vm1415, %v2235
        %2253 = vst.msk [vmem:[%s2244 + $0x80] sm:$0xff] %vm1415, %v2236
        %2254 = vst.msk [vmem:[%s2244 + $0x88] sm:$0xff] %vm1415, %v2237
        %2255 = vst.msk [vmem:[%s2244 + $0xa0] sm:$0xff] %vm1415, %v2238
        %2256 = vst.msk [vmem:[%s2244 + $0xa8] sm:$0xff] %vm1415, %v2239
        %2257 = vst.msk [vmem:[%s2244 + $0xc0] sm:$0xff] %vm1415, %v2240
        %2258 = vst.msk [vmem:[%s2244 + $0xc8] sm:$0xff] %vm1415, %v2241
        %2259 = vst.msk [vmem:[%s2244 + $0xe0] sm:$0xff] %vm1415, %v2242
        %2260 = vst.msk [vmem:[%s2244 + $0xe8] sm:$0xff] %vm1415, %v2243
        %s2261 = sand.u32 %s164, 1
        %s2262 = scalar_lea.sflag [#allocation3], %s2261
        %s2263 = sand.u32 %s164, 1
        %s2264 = smul.addr %s2263, 256
        %s2265 = scalar_lea.vmem [#allocation2], %s2264
        // Predicated region
        $region41: #{tpu_custom_call.1} parent=39 // pred_check
          %p2266 = pneg %p174
        $region42: #{tpu_custom_call.1} parent=39 // pred_check_branch
          %2268 = sbr.rel (%p2266) target = $region44
        $region43: #{tpu_custom_call.1} parent=39 // pred_region
          %s2269 = smul.u32 8, %s24
          %2271 = vsyncadd %s2262, 0
          %s2272 = smul.addr %s2269, 4
          %s2273 = smul.addr %s23, 64
          %s2274 = sadd.s32 %s2272, %s2273
          %s2275 = smul.addr %s2274, 8
          %s2276 = scalar_lea.hbm %s5, %s2275
          %s2277 = sshll.u32 %s2265, 4
          %s2278 = int_to_ptr.vmem [resolvable:$true] %s2277
          %s2279 = sshll.u32 %s2276, 4
          %s2280 = int_to_ptr.hbm [resolvable:$true] %s2279
          %2285 = dma.vmem_to_hbm [thread:$0]  %s2278, 4096, %s2280, %s2262, 128, 128, 8
        $region44: #{tpu_custom_call.1} parent=39 // pred_fallthru
          _
      $region40: #{tpu_custom_call.1} parent=5 // pred_fallthru
        _
      %p2286 = scmp.le.s32.totalorder 2, %s14
      // Predicated region
      $region45: #{tpu_custom_call.1} parent=5 // pred_check
        %p2287 = pneg %p2286
      $region46: #{tpu_custom_call.1} parent=5 // pred_check_branch
        %2289 = sbr.rel (%p2287) target = $region48
      $region47: #{tpu_custom_call.1} parent=5 // pred_region
        %s2290 = ssub.s32 %s14, 2
        // Predicated region
        $region49: #{tpu_custom_call.1} parent=47 // pred_check
          %p2291 = pneg %p180
        $region50: #{tpu_custom_call.1} parent=47 // pred_check_branch
          %2293 = sbr.rel (%p2291) target = $region52
        $region51: #{tpu_custom_call.1} parent=47 // pred_region
          %s2294 = sand.u32 %s165, 1
          %s2295 = scalar_lea.sflag [#allocation3], %s2294
          %s2296 = sand.u32 %s165, 1
          %s2297 = smul.addr %s2296, 256
          %s2298 = scalar_lea.vmem [#allocation2], %s2297
          %2300 = dma.done %s2295, 4096
        $region52: #{tpu_custom_call.1} parent=47 // pred_fallthru
          _
      $region48: #{tpu_custom_call.1} parent=5 // pred_fallthru
        _
    $region6: #{tpu_custom_call.1} parent=1 // loop_footer
      %s18 = sadd.s32 1, %s14
    $region7: #{tpu_custom_call.1} parent=1 // loop_footer_branch
      %13 = sbr.rel target = $region3
    $region8: #{tpu_custom_call.1} parent=1 // loop_exit
      _
    %2301 = vsyncpa [#allocation3], 1
    %s2302 = scalar_lea.sflag [#allocation3], 1
    %2303 = vsyncpa %s2302, 1

</llo_original>
